<compile_context>
chip_gen: v5e
topology: v5e:2x2
jax: 0.10.0
libtpu: 0.0.40
codegen_flags: <defaults>
</compile_context>

<pallas_src>
import numpy as np
import jax
import jax.numpy as jnp
from jax.experimental import pallas as pl
from jax.experimental.pallas import tpu as pltpu

# --- model hyperparameters (globals in the reference code) ---
d_model = 32
d_k = 8
d_v = 8
n_heads = 4


# ----------------------------------------------------------------------------
# Fused kernel (one grid step = one batch element):
# QKV proj -> batched per-head scaled-dot-product attention -> output proj ->
# residual add -> LayerNorm.
# ----------------------------------------------------------------------------
def _mha_kernel(q_ref, k_ref, v_ref, mask_ref,
                wq_ref, bq_ref, wk_ref, bk_ref, wv_ref, bv_ref,
                wo_ref, bo_ref, g_ref, beta_ref,
                out_ref, attn_ref):
    S = q_ref.shape[1]

    x = q_ref[0]                                     # (S, d_model) — residual = Q
    kin = k_ref[0]
    vin = v_ref[0]

    # Three separate projections: lane-0-aligned outputs, zero wasted MXU work.
    qp = jnp.dot(x,   wq_ref[...], preferred_element_type=jnp.float32) + bq_ref[...]
    kp = jnp.dot(kin, wk_ref[...], preferred_element_type=jnp.float32) + bk_ref[...]
    vp = jnp.dot(vin, wv_ref[...], preferred_element_type=jnp.float32) + bv_ref[...]

    # (S, H*d) -> (H, S, d): heads become the leading batch dim of one
    # batched contraction (no per-head unrolled loop).
    qh = qp.reshape(S, n_heads, d_k).swapaxes(0, 1)
    kh = kp.reshape(S, n_heads, d_k).swapaxes(0, 1)
    vh = vp.reshape(S, n_heads, d_v).swapaxes(0, 1)

    scale = jnp.float32(1.0 / np.sqrt(d_k))
    scores = jnp.einsum("hqd,hkd->hqk", qh, kh,
                        preferred_element_type=jnp.float32) * scale     # (H, S, S)

    # masked_fill_(attn_mask, -1e9) — mask built in-kernel from int flags.
    mask = mask_ref[0]                               # (S, S) int32, nonzero = masked
    scores = jnp.where(mask[None, :, :] != 0, jnp.float32(-1e9), scores)

    # Softmax over keys; reciprocal goes to the otherwise-idle EUP slot.
    m = jnp.max(scores, axis=-1, keepdims=True)
    e = jnp.exp(scores - m)
    s = jnp.sum(e, axis=-1, keepdims=True)
    attn = e * pl.reciprocal(s, approx=False)        # (H, S, S)

    # Attention weights already in their final (H, S, S) order — direct store.
    attn_ref[0] = attn

    # Context: one batched matmul, then back to (S, H*d_v) for the output proj.
    ctx = jnp.einsum("hqk,hkd->hqd", attn, vh,
                     preferred_element_type=jnp.float32)
    ctx = ctx.swapaxes(0, 1).reshape(S, n_heads * d_v)

    # Output projection + residual + LayerNorm (eps=1e-5, PyTorch default).
    out = jnp.dot(ctx, wo_ref[...], preferred_element_type=jnp.float32) + bo_ref[...]
    xres = out + x
    mean = jnp.mean(xres, axis=-1, keepdims=True)
    var = jnp.mean((xres - mean) ** 2, axis=-1, keepdims=True)
    y = (xres - mean) * jax.lax.rsqrt(var + jnp.float32(1e-5))
    out_ref[0] = y * g_ref[...] + beta_ref[...]


def multi_head_attention(Q, K, V, attn_mask, params):
    B, S, _ = Q.shape

    # bool -> int32 once (tiny); avoids bool memrefs, -1e9 fill happens in-kernel.
    mask_i32 = attn_mask.astype(jnp.int32)

    def full2(r, c):
        return pl.BlockSpec((r, c), lambda b: (0, 0))

    out, attn = pl.pallas_call(
        _mha_kernel,
        out_shape=(
            jax.ShapeDtypeStruct((B, S, d_model), jnp.float32),
            jax.ShapeDtypeStruct((B, n_heads, S, S), jnp.float32),
        ),
        grid=(B,),
        in_specs=[
            pl.BlockSpec((1, S, d_model), lambda b: (b, 0, 0)),   # Q
            pl.BlockSpec((1, S, d_model), lambda b: (b, 0, 0)),   # K
            pl.BlockSpec((1, S, d_model), lambda b: (b, 0, 0)),   # V
            pl.BlockSpec((1, S, S), lambda b: (b, 0, 0)),         # mask (int32)
            full2(d_model, n_heads * d_k),                        # wq
            full2(1, n_heads * d_k),                              # bq
            full2(d_model, n_heads * d_k),                        # wk
            full2(1, n_heads * d_k),                              # bk
            full2(d_model, n_heads * d_v),                        # wv
            full2(1, n_heads * d_v),                              # bv
            full2(n_heads * d_v, d_model),                        # wo
            full2(1, d_model),                                    # bo
            full2(1, d_model),                                    # ln gamma
            full2(1, d_model),                                    # ln beta
        ],
        out_specs=(
            pl.BlockSpec((1, S, d_model), lambda b: (b, 0, 0)),
            pl.BlockSpec((1, n_heads, S, S), lambda b: (b, 0, 0, 0)),
        ),
        compiler_params=pltpu.CompilerParams(
            dimension_semantics=("parallel",)),        # batch axis -> both TCs on v7x
    )(Q, K, V, mask_i32,
      params["wq"], params["bq"], params["wk"], params["bk"],
      params["wv"], params["bv"], params["wo"], params["bo"],
      params["ln_g"], params["ln_b"])

    return out, attn


# ----------------------------------------------------------------------------
# Pure-JAX reference (mirrors the PyTorch module) for verification.
# ----------------------------------------------------------------------------
def reference(Q, K, V, attn_mask, params):
    B, S, _ = Q.shape
    q_s = (Q @ params["wq"] + params["bq"]).reshape(B, S, n_heads, d_k).transpose(0, 2, 1, 3)
    k_s = (K @ params["wk"] + params["bk"]).reshape(B, S, n_heads, d_k).transpose(0, 2, 1, 3)
    v_s = (V @ params["wv"] + params["bv"]).reshape(B, S, n_heads, d_v).transpose(0, 2, 1, 3)
    scores = jnp.einsum("bhqd,bhkd->bhqk", q_s, k_s) / np.sqrt(d_k)
    scores = jnp.where(attn_mask[:, None, :, :], -1e9, scores)
    attn = jax.nn.softmax(scores, axis=-1)
    ctx = jnp.einsum("bhqk,bhkd->bhqd", attn, v_s)
    ctx = ctx.transpose(0, 2, 1, 3).reshape(B, S, n_heads * d_v)
    out = ctx @ params["wo"] + params["bo"]
    x = out + Q
    mean = jnp.mean(x, axis=-1, keepdims=True)
    var = jnp.mean((x - mean) ** 2, axis=-1, keepdims=True)
    y = (x - mean) / jnp.sqrt(var + 1e-5)
    return y * params["ln_g"] + params["ln_b"], attn


if __name__ == "__main__":
    key = jax.random.PRNGKey(0)
    B, S = 2, 8

    ks = jax.random.split(key, 12)
    scale = 1.0 / np.sqrt(d_model)
    params = {
        "wq": jax.random.uniform(ks[0], (d_model, d_k * n_heads), jnp.float32, -scale, scale),
        "bq": jax.random.uniform(ks[1], (1, d_k * n_heads), jnp.float32, -scale, scale),
        "wk": jax.random.uniform(ks[2], (d_model, d_k * n_heads), jnp.float32, -scale, scale),
        "bk": jax.random.uniform(ks[3], (1, d_k * n_heads), jnp.float32, -scale, scale),
        "wv": jax.random.uniform(ks[4], (d_model, d_v * n_heads), jnp.float32, -scale, scale),
        "bv": jax.random.uniform(ks[5], (1, d_v * n_heads), jnp.float32, -scale, scale),
        "wo": jax.random.uniform(ks[6], (n_heads * d_v, d_model), jnp.float32, -scale, scale),
        "bo": jax.random.uniform(ks[7], (1, d_model), jnp.float32, -scale, scale),
        "ln_g": jnp.ones((1, d_model), jnp.float32),
        "ln_b": jnp.zeros((1, d_model), jnp.float32),
    }

    Q = jax.random.normal(ks[8], (B, S, d_model), jnp.float32)
    K = jax.random.normal(ks[9], (B, S, d_model), jnp.float32)
    V = jax.random.normal(ks[10], (B, S, d_model), jnp.float32)
    # e.g. padding mask: last 2 key positions masked out
    attn_mask = jnp.zeros((B, S, S), dtype=bool).at[:, :, -2:].set(True)

    out, attn = multi_head_attention(Q, K, V, attn_mask, params)
    out = jax.block_until_ready(out)
    attn = jax.block_until_ready(attn)

    out_ref, attn_ref = reference(Q, K, V, attn_mask, params)
    assert out.shape == (B, S, d_model) and attn.shape == (B, n_heads, S, S)
    np.testing.assert_allclose(np.asarray(out), np.asarray(out_ref), rtol=1e-4, atol=1e-4)
    np.testing.assert_allclose(np.asarray(attn), np.asarray(attn_ref), rtol=1e-4, atol=1e-4)

    print("KERNEL_OK")
</pallas_src>

<mosaic_0001>
module attributes {stable_mosaic.version = 11 : i64} {
  func.func @_mha_kernel(%arg0: i32, %arg1: memref<1x8x32xf32, #tpu.memory_space<vmem>>, %arg2: memref<1x8x32xf32, #tpu.memory_space<vmem>>, %arg3: memref<1x8x32xf32, #tpu.memory_space<vmem>>, %arg4: memref<1x8x8xi32, #tpu.memory_space<vmem>>, %arg5: memref<32x32xf32, #tpu.memory_space<vmem>>, %arg6: memref<1x32xf32, #tpu.memory_space<vmem>>, %arg7: memref<32x32xf32, #tpu.memory_space<vmem>>, %arg8: memref<1x32xf32, #tpu.memory_space<vmem>>, %arg9: memref<32x32xf32, #tpu.memory_space<vmem>>, %arg10: memref<1x32xf32, #tpu.memory_space<vmem>>, %arg11: memref<32x32xf32, #tpu.memory_space<vmem>>, %arg12: memref<1x32xf32, #tpu.memory_space<vmem>>, %arg13: memref<1x32xf32, #tpu.memory_space<vmem>>, %arg14: memref<1x32xf32, #tpu.memory_space<vmem>>, %arg15: memref<1x8x32xf32, #tpu.memory_space<vmem>>, %arg16: memref<1x4x8x8xf32, #tpu.memory_space<vmem>>) attributes {dimension_semantics = [#tpu.dimension_semantics<parallel>], iteration_bounds = array<i64: 2>, scalar_prefetch = 0 : i64, scratch_operands = 0 : i64, tpu.core_type = #tpu.core_type<tc>, window_params = [{transform_indices = @transform_0, window_bounds = array<i64: 1, 8, 32>}, {transform_indices = @transform_1, window_bounds = array<i64: 1, 8, 32>}, {transform_indices = @transform_2, window_bounds = array<i64: 1, 8, 32>}, {transform_indices = @transform_3, window_bounds = array<i64: 1, 8, 8>}, {pipeline_mode = #tpu.pipeline_mode<synchronous>, transform_indices = @transform_4, window_bounds = array<i64: 32, 32>}, {pipeline_mode = #tpu.pipeline_mode<synchronous>, transform_indices = @transform_5, window_bounds = array<i64: 1, 32>}, {pipeline_mode = #tpu.pipeline_mode<synchronous>, transform_indices = @transform_6, window_bounds = array<i64: 32, 32>}, {pipeline_mode = #tpu.pipeline_mode<synchronous>, transform_indices = @transform_7, window_bounds = array<i64: 1, 32>}, {pipeline_mode = #tpu.pipeline_mode<synchronous>, transform_indices = @transform_8, window_bounds = array<i64: 32, 32>}, {pipeline_mode = #tpu.pipeline_mode<synchronous>, transform_indices = @transform_9, window_bounds = array<i64: 1, 32>}, {pipeline_mode = #tpu.pipeline_mode<synchronous>, transform_indices = @transform_10, window_bounds = array<i64: 32, 32>}, {pipeline_mode = #tpu.pipeline_mode<synchronous>, transform_indices = @transform_11, window_bounds = array<i64: 1, 32>}, {pipeline_mode = #tpu.pipeline_mode<synchronous>, transform_indices = @transform_12, window_bounds = array<i64: 1, 32>}, {pipeline_mode = #tpu.pipeline_mode<synchronous>, transform_indices = @transform_13, window_bounds = array<i64: 1, 32>}, {transform_indices = @transform_14, window_bounds = array<i64: 1, 8, 32>}, {transform_indices = @transform_15, window_bounds = array<i64: 1, 4, 8, 8>}]} {
    %c0 = arith.constant 0 : index
    %c0_0 = arith.constant 0 : index
    %c0_1 = arith.constant 0 : index
    %0 = vector.load %arg1[%c0, %c0_0, %c0_1] : memref<1x8x32xf32, #tpu.memory_space<vmem>>, vector<1x8x32xf32>
    %1 = vector.shape_cast %0 : vector<1x8x32xf32> to vector<8x32xf32>
    %c0_2 = arith.constant 0 : index
    %c0_3 = arith.constant 0 : index
    %c0_4 = arith.constant 0 : index
    %2 = vector.load %arg2[%c0_2, %c0_3, %c0_4] : memref<1x8x32xf32, #tpu.memory_space<vmem>>, vector<1x8x32xf32>
    %3 = vector.shape_cast %2 : vector<1x8x32xf32> to vector<8x32xf32>
    %c0_5 = arith.constant 0 : index
    %c0_6 = arith.constant 0 : index
    %c0_7 = arith.constant 0 : index
    %4 = vector.load %arg3[%c0_5, %c0_6, %c0_7] : memref<1x8x32xf32, #tpu.memory_space<vmem>>, vector<1x8x32xf32>
    %5 = vector.shape_cast %4 : vector<1x8x32xf32> to vector<8x32xf32>
    %c0_8 = arith.constant 0 : index
    %c0_9 = arith.constant 0 : index
    %6 = vector.load %arg5[%c0_8, %c0_9] : memref<32x32xf32, #tpu.memory_space<vmem>>, vector<32x32xf32>
    %cst = arith.constant dense<0.000000e+00> : vector<8x32xf32>
    %7 = tpu.matmul %1, %6, %cst {dimension_numbers = #tpu.dot_dimension_numbers<[1], [0], [0], [1], [0, 0, 1, 1], [], []>} : vector<8x32xf32>, vector<32x32xf32>, vector<8x32xf32> -> vector<8x32xf32>
    %c0_10 = arith.constant 0 : index
    %c0_11 = arith.constant 0 : index
    %8 = vector.load %arg6[%c0_10, %c0_11] : memref<1x32xf32, #tpu.memory_space<vmem>>, vector<1x32xf32>
    %9 = vector.broadcast %8 : vector<1x32xf32> to vector<8x32xf32>
    %10 = arith.addf %7, %9 : vector<8x32xf32>
    %c0_12 = arith.constant 0 : index
    %c0_13 = arith.constant 0 : index
    %11 = vector.load %arg7[%c0_12, %c0_13] : memref<32x32xf32, #tpu.memory_space<vmem>>, vector<32x32xf32>
    %cst_14 = arith.constant dense<0.000000e+00> : vector<8x32xf32>
    %12 = tpu.matmul %3, %11, %cst_14 {dimension_numbers = #tpu.dot_dimension_numbers<[1], [0], [0], [1], [0, 0, 1, 1], [], []>} : vector<8x32xf32>, vector<32x32xf32>, vector<8x32xf32> -> vector<8x32xf32>
    %c0_15 = arith.constant 0 : index
    %c0_16 = arith.constant 0 : index
    %13 = vector.load %arg8[%c0_15, %c0_16] : memref<1x32xf32, #tpu.memory_space<vmem>>, vector<1x32xf32>
    %14 = vector.broadcast %13 : vector<1x32xf32> to vector<8x32xf32>
    %15 = arith.addf %12, %14 : vector<8x32xf32>
    %c0_17 = arith.constant 0 : index
    %c0_18 = arith.constant 0 : index
    %16 = vector.load %arg9[%c0_17, %c0_18] : memref<32x32xf32, #tpu.memory_space<vmem>>, vector<32x32xf32>
    %cst_19 = arith.constant dense<0.000000e+00> : vector<8x32xf32>
    %17 = tpu.matmul %5, %16, %cst_19 {dimension_numbers = #tpu.dot_dimension_numbers<[1], [0], [0], [1], [0, 0, 1, 1], [], []>} : vector<8x32xf32>, vector<32x32xf32>, vector<8x32xf32> -> vector<8x32xf32>
    %c0_20 = arith.constant 0 : index
    %c0_21 = arith.constant 0 : index
    %18 = vector.load %arg10[%c0_20, %c0_21] : memref<1x32xf32, #tpu.memory_space<vmem>>, vector<1x32xf32>
    %19 = vector.broadcast %18 : vector<1x32xf32> to vector<8x32xf32>
    %20 = arith.addf %17, %19 : vector<8x32xf32>
    %21 = vector.shape_cast %10 : vector<8x32xf32> to vector<8x4x8xf32>
    %22 = tpu.transpose %21, [1, 0, 2] : vector<8x4x8xf32> -> vector<4x8x8xf32>
    %23 = vector.shape_cast %15 : vector<8x32xf32> to vector<8x4x8xf32>
    %24 = tpu.transpose %23, [1, 0, 2] : vector<8x4x8xf32> -> vector<4x8x8xf32>
    %25 = vector.shape_cast %20 : vector<8x32xf32> to vector<8x4x8xf32>
    %26 = tpu.transpose %25, [1, 0, 2] : vector<8x4x8xf32> -> vector<4x8x8xf32>
    "tpu.trace_start"() <{level = 10 : i32, message = "hqd,hkd->hqk"}> : () -> ()
    %cst_22 = arith.constant dense<0.000000e+00> : vector<4x8x8xf32>
    %27 = tpu.matmul %22, %24, %cst_22 {dimension_numbers = #tpu.dot_dimension_numbers<[2], [2], [1], [1], [0, 0, 0, 1, 1, 1], [0], [0]>} : vector<4x8x8xf32>, vector<4x8x8xf32>, vector<4x8x8xf32> -> vector<4x8x8xf32>
    "tpu.trace_stop"() : () -> ()
    %cst_23 = arith.constant 0.353553385 : f32
    %28 = vector.broadcast %cst_23 : f32 to vector<4x8x8xf32>
    %29 = arith.mulf %27, %28 : vector<4x8x8xf32>
    %c0_24 = arith.constant 0 : index
    %c0_25 = arith.constant 0 : index
    %c0_26 = arith.constant 0 : index
    %30 = vector.load %arg4[%c0_24, %c0_25, %c0_26] : memref<1x8x8xi32, #tpu.memory_space<vmem>>, vector<1x8x8xi32>
    %31 = vector.shape_cast %30 : vector<1x8x8xi32> to vector<8x8xi32>
    %32 = vector.shape_cast %31 : vector<8x8xi32> to vector<1x8x8xi32>
    %c0_i32 = arith.constant 0 : i32
    %33 = vector.broadcast %c0_i32 : i32 to vector<1x8x8xi32>
    %34 = arith.cmpi ne, %32, %33 : vector<1x8x8xi32>
    %cst_27 = arith.constant -1.000000e+09 : f32
    %35 = vector.shape_cast %34 : vector<1x8x8xi1> to vector<1x8x8xi1>
    %36 = vector.broadcast %35 : vector<1x8x8xi1> to vector<4x8x8xi1>
    %37 = vector.broadcast %cst_27 : f32 to vector<4x8x8xf32>
    %38 = arith.select %36, %37, %29 : vector<4x8x8xi1>, vector<4x8x8xf32>
    %cst_28 = arith.constant dense<0xFF800000> : vector<4x8xf32>
    %39 = vector.multi_reduction <maximumf>, %38, %cst_28 [2] : vector<4x8x8xf32> to vector<4x8xf32>
    %40 = vector.shape_cast %39 : vector<4x8xf32> to vector<4x8x1xf32>
    %41 = vector.broadcast %40 : vector<4x8x1xf32> to vector<4x8x8xf32>
    %42 = arith.subf %38, %41 : vector<4x8x8xf32>
    %43 = math.exp %42 : vector<4x8x8xf32>
    %cst_29 = arith.constant dense<0.000000e+00> : vector<4x8xf32>
    %44 = vector.multi_reduction <add>, %43, %cst_29 [2] : vector<4x8x8xf32> to vector<4x8xf32>
    %45 = vector.shape_cast %44 : vector<4x8xf32> to vector<4x8x1xf32>
    %46 = tpu.reciprocal %45 : vector<4x8x1xf32> -> vector<4x8x1xf32>
    %47 = vector.broadcast %46 : vector<4x8x1xf32> to vector<4x8x8xf32>
    %48 = arith.mulf %43, %47 : vector<4x8x8xf32>
    %c0_30 = arith.constant 0 : index
    %c0_31 = arith.constant 0 : index
    %c0_32 = arith.constant 0 : index
    %c0_33 = arith.constant 0 : index
    %49 = vector.load %arg16[%c0_30, %c0_31, %c0_32, %c0_33] : memref<1x4x8x8xf32, #tpu.memory_space<vmem>>, vector<1x4x8x8xf32>
    %50 = vector.shape_cast %49 : vector<1x4x8x8xf32> to vector<4x8x8xf32>
    %51 = vector.shape_cast %48 : vector<4x8x8xf32> to vector<1x4x8x8xf32>
    tpu.vector_store %arg16[%c0_30, %c0_31, %c0_32, %c0_33], %51 {strides = array<i32>} : memref<1x4x8x8xf32, #tpu.memory_space<vmem>>, vector<1x4x8x8xf32>,
    "tpu.trace_start"() <{level = 10 : i32, message = "hqk,hkd->hqd"}> : () -> ()
    %cst_34 = arith.constant dense<0.000000e+00> : vector<4x8x8xf32>
    %52 = tpu.matmul %48, %26, %cst_34 {dimension_numbers = #tpu.dot_dimension_numbers<[2], [1], [1], [2], [0, 0, 0, 1, 1, 2], [0], [0]>} : vector<4x8x8xf32>, vector<4x8x8xf32>, vector<4x8x8xf32> -> vector<4x8x8xf32>
    "tpu.trace_stop"() : () -> ()
    %53 = tpu.transpose %52, [1, 0, 2] : vector<4x8x8xf32> -> vector<8x4x8xf32>
    %54 = vector.shape_cast %53 : vector<8x4x8xf32> to vector<8x32xf32>
    %c0_35 = arith.constant 0 : index
    %c0_36 = arith.constant 0 : index
    %55 = vector.load %arg11[%c0_35, %c0_36] : memref<32x32xf32, #tpu.memory_space<vmem>>, vector<32x32xf32>
    %cst_37 = arith.constant dense<0.000000e+00> : vector<8x32xf32>
    %56 = tpu.matmul %54, %55, %cst_37 {dimension_numbers = #tpu.dot_dimension_numbers<[1], [0], [0], [1], [0, 0, 1, 1], [], []>} : vector<8x32xf32>, vector<32x32xf32>, vector<8x32xf32> -> vector<8x32xf32>
    %c0_38 = arith.constant 0 : index
    %c0_39 = arith.constant 0 : index
    %57 = vector.load %arg12[%c0_38, %c0_39] : memref<1x32xf32, #tpu.memory_space<vmem>>, vector<1x32xf32>
    %58 = vector.broadcast %57 : vector<1x32xf32> to vector<8x32xf32>
    %59 = arith.addf %56, %58 : vector<8x32xf32>
    %60 = arith.addf %59, %1 : vector<8x32xf32>
    %cst_40 = arith.constant dense<0.000000e+00> : vector<8xf32>
    %61 = vector.multi_reduction <add>, %60, %cst_40 [1] : vector<8x32xf32> to vector<8xf32>
    %62 = vector.shape_cast %61 : vector<8xf32> to vector<8x1xf32>
    %cst_41 = arith.constant 3.200000e+01 : f32
    %63 = vector.broadcast %cst_41 : f32 to vector<8x1xf32>
    %64 = arith.divf %62, %63 : vector<8x1xf32>
    %65 = vector.broadcast %64 : vector<8x1xf32> to vector<8x32xf32>
    %66 = arith.subf %60, %65 : vector<8x32xf32>
    %67 = arith.mulf %66, %66 : vector<8x32xf32>
    %cst_42 = arith.constant dense<0.000000e+00> : vector<8xf32>
    %68 = vector.multi_reduction <add>, %67, %cst_42 [1] : vector<8x32xf32> to vector<8xf32>
    %69 = vector.shape_cast %68 : vector<8xf32> to vector<8x1xf32>
    %cst_43 = arith.constant 3.200000e+01 : f32
    %70 = vector.broadcast %cst_43 : f32 to vector<8x1xf32>
    %71 = arith.divf %69, %70 : vector<8x1xf32>
    %72 = vector.broadcast %64 : vector<8x1xf32> to vector<8x32xf32>
    %73 = arith.subf %60, %72 : vector<8x32xf32>
    %cst_44 = arith.constant 9.99999974E-6 : f32
    %74 = vector.broadcast %cst_44 : f32 to vector<8x1xf32>
    %75 = arith.addf %71, %74 : vector<8x1xf32>
    %76 = math.rsqrt %75 : vector<8x1xf32>
    %77 = vector.broadcast %76 : vector<8x1xf32> to vector<8x32xf32>
    %78 = arith.mulf %73, %77 : vector<8x32xf32>
    %c0_45 = arith.constant 0 : index
    %c0_46 = arith.constant 0 : index
    %79 = vector.load %arg13[%c0_45, %c0_46] : memref<1x32xf32, #tpu.memory_space<vmem>>, vector<1x32xf32>
    %80 = vector.broadcast %79 : vector<1x32xf32> to vector<8x32xf32>
    %81 = arith.mulf %78, %80 : vector<8x32xf32>
    %c0_47 = arith.constant 0 : index
    %c0_48 = arith.constant 0 : index
    %82 = vector.load %arg14[%c0_47, %c0_48] : memref<1x32xf32, #tpu.memory_space<vmem>>, vector<1x32xf32>
    %83 = vector.broadcast %82 : vector<1x32xf32> to vector<8x32xf32>
    %84 = arith.addf %81, %83 : vector<8x32xf32>
    %c0_49 = arith.constant 0 : index
    %c0_50 = arith.constant 0 : index
    %c0_51 = arith.constant 0 : index
    %85 = vector.load %arg15[%c0_49, %c0_50, %c0_51] : memref<1x8x32xf32, #tpu.memory_space<vmem>>, vector<1x8x32xf32>
    %86 = vector.shape_cast %85 : vector<1x8x32xf32> to vector<8x32xf32>
    %87 = vector.shape_cast %84 : vector<8x32xf32> to vector<1x8x32xf32>
    tpu.vector_store %arg15[%c0_49, %c0_50, %c0_51], %87 {strides = array<i32>} : memref<1x8x32xf32, #tpu.memory_space<vmem>>, vector<1x8x32xf32>,
    return
  }
  func.func @transform_0(%arg0: i32) -> (i32, i32, i32) {
    %c0_i32 = arith.constant 0 : i32
    %c0_i32_0 = arith.constant 0 : i32
    %c0_i32_1 = arith.constant 0 : i32
    return %arg0, %c0_i32, %c0_i32_0 : i32, i32, i32
  }
  func.func @transform_1(%arg0: i32) -> (i32, i32, i32) {
    %c0_i32 = arith.constant 0 : i32
    %c0_i32_0 = arith.constant 0 : i32
    %c0_i32_1 = arith.constant 0 : i32
    return %arg0, %c0_i32, %c0_i32_0 : i32, i32, i32
  }
  func.func @transform_2(%arg0: i32) -> (i32, i32, i32) {
    %c0_i32 = arith.constant 0 : i32
    %c0_i32_0 = arith.constant 0 : i32
    %c0_i32_1 = arith.constant 0 : i32
    return %arg0, %c0_i32, %c0_i32_0 : i32, i32, i32
  }
  func.func @transform_3(%arg0: i32) -> (i32, i32, i32) {
    %c0_i32 = arith.constant 0 : i32
    %c0_i32_0 = arith.constant 0 : i32
    %c0_i32_1 = arith.constant 0 : i32
    return %arg0, %c0_i32, %c0_i32_0 : i32, i32, i32
  }
  func.func @transform_4(%arg0: i32) -> (i32, i32) {
    %c0_i32 = arith.constant 0 : i32
    %c0_i32_0 = arith.constant 0 : i32
    %c0_i32_1 = arith.constant 0 : i32
    return %c0_i32, %c0_i32_0 : i32, i32
  }
  func.func @transform_5(%arg0: i32) -> (i32, i32) {
    %c0_i32 = arith.constant 0 : i32
    %c0_i32_0 = arith.constant 0 : i32
    %c0_i32_1 = arith.constant 0 : i32
    return %c0_i32, %c0_i32_0 : i32, i32
  }
  func.func @transform_6(%arg0: i32) -> (i32, i32) {
    %c0_i32 = arith.constant 0 : i32
    %c0_i32_0 = arith.constant 0 : i32
    %c0_i32_1 = arith.constant 0 : i32
    return %c0_i32, %c0_i32_0 : i32, i32
  }
  func.func @transform_7(%arg0: i32) -> (i32, i32) {
    %c0_i32 = arith.constant 0 : i32
    %c0_i32_0 = arith.constant 0 : i32
    %c0_i32_1 = arith.constant 0 : i32
    return %c0_i32, %c0_i32_0 : i32, i32
  }
  func.func @transform_8(%arg0: i32) -> (i32, i32) {
    %c0_i32 = arith.constant 0 : i32
    %c0_i32_0 = arith.constant 0 : i32
    %c0_i32_1 = arith.constant 0 : i32
    return %c0_i32, %c0_i32_0 : i32, i32
  }
  func.func @transform_9(%arg0: i32) -> (i32, i32) {
    %c0_i32 = arith.constant 0 : i32
    %c0_i32_0 = arith.constant 0 : i32
    %c0_i32_1 = arith.constant 0 : i32
    return %c0_i32, %c0_i32_0 : i32, i32
  }
  func.func @transform_10(%arg0: i32) -> (i32, i32) {
    %c0_i32 = arith.constant 0 : i32
    %c0_i32_0 = arith.constant 0 : i32
    %c0_i32_1 = arith.constant 0 : i32
    return %c0_i32, %c0_i32_0 : i32, i32
  }
  func.func @transform_11(%arg0: i32) -> (i32, i32) {
    %c0_i32 = arith.constant 0 : i32
    %c0_i32_0 = arith.constant 0 : i32
    %c0_i32_1 = arith.constant 0 : i32
    return %c0_i32, %c0_i32_0 : i32, i32
  }
  func.func @transform_12(%arg0: i32) -> (i32, i32) {
    %c0_i32 = arith.constant 0 : i32
    %c0_i32_0 = arith.constant 0 : i32
    %c0_i32_1 = arith.constant 0 : i32
    return %c0_i32, %c0_i32_0 : i32, i32
  }
  func.func @transform_13(%arg0: i32) -> (i32, i32) {
    %c0_i32 = arith.constant 0 : i32
    %c0_i32_0 = arith.constant 0 : i32
    %c0_i32_1 = arith.constant 0 : i32
    return %c0_i32, %c0_i32_0 : i32, i32
  }
  func.func @transform_14(%arg0: i32) -> (i32, i32, i32) {
    %c0_i32 = arith.constant 0 : i32
    %c0_i32_0 = arith.constant 0 : i32
    %c0_i32_1 = arith.constant 0 : i32
    return %arg0, %c0_i32, %c0_i32_0 : i32, i32, i32
  }
  func.func @transform_15(%arg0: i32) -> (i32, i32, i32, i32) {
    %c0_i32 = arith.constant 0 : i32
    %c0_i32_0 = arith.constant 0 : i32
    %c0_i32_1 = arith.constant 0 : i32
    %c0_i32_2 = arith.constant 0 : i32
    return %arg0, %c0_i32, %c0_i32_0, %c0_i32_1 : i32, i32, i32, i32
  }
}

</mosaic_0001>

<llo_original>
// kernel: tpu_custom_call.1
$region0: #{tpu_custom_call.1}
  #allocation0 [shape = 'u32[]', space=smem, size = 0x4, offset = 0x4, fixed_abs, tag = 'smem constant byte address 0x4 - core index']
  #allocation1 [shape = 'u32[72,128]{1,0:T(1,128)}', space=vmem, size = 0x9000, scoped, tag = 'internal scratch']
  %s0 = inlined_call_operand.hbm [shape: f32[2,8,32], index: 0, kind: input, shape index: {}]
  %s1 = inlined_call_operand.hbm [shape: f32[2,8,32], index: 1, kind: input, shape index: {}]
  %s2 = inlined_call_operand.hbm [shape: f32[2,8,32], index: 2, kind: input, shape index: {}]
  %s3 = inlined_call_operand.hbm [shape: s32[2,8,8], index: 3, kind: input, shape index: {}]
  %s4 = inlined_call_operand.hbm [shape: f32[32,32], index: 4, kind: input, shape index: {}]
  %s5 = inlined_call_operand.vmem [shape: f32[1,32], index: 5, kind: input, shape index: {}]
  %s6 = inlined_call_operand.hbm [shape: f32[32,32], index: 6, kind: input, shape index: {}]
  %s7 = inlined_call_operand.vmem [shape: f32[1,32], index: 7, kind: input, shape index: {}]
  %s8 = inlined_call_operand.hbm [shape: f32[32,32], index: 8, kind: input, shape index: {}]
  %s9 = inlined_call_operand.vmem [shape: f32[1,32], index: 9, kind: input, shape index: {}]
  %s10 = inlined_call_operand.hbm [shape: f32[32,32], index: 10, kind: input, shape index: {}]
  %s11 = inlined_call_operand.vmem [shape: f32[1,32], index: 11, kind: input, shape index: {}]
  %s12 = inlined_call_operand.vmem [shape: f32[1,32], index: 12, kind: input, shape index: {}]
  %s13 = inlined_call_operand.vmem [shape: f32[1,32], index: 13, kind: input, shape index: {}]
  %s14 = inlined_call_operand.hbm [shape: f32[2,8,32], index: 14, kind: output, shape index: {0}]
  %s15 = inlined_call_operand.hbm [shape: f32[2,4,8,8], index: 15, kind: output, shape index: {1}]
  %16 = xla_tuple %s14, %s15
  %s17 = sld [smem:[#allocation0]]
  $region129: #{tpu_custom_call.1} parent=0
    _
  %s19 = ssub.s32 1, %s17
  %s20 = scalar_select 0, %s19, %s17
  $region1: #{tpu_custom_call.1} parent=0
    #allocation2 [shape = 'u8[8192]{0}', space=vmem, size = 0x2000, scoped, tag = 'input window, operand 0']
    #allocation3 [shape = 's32[2]{0}', space=sflag, size = 0x8, scoped, tag = 'scoped memory for tpu_custom_call.1']
    #allocation4 [shape = 's32[2]{0}', space=sflag, size = 0x8, scoped, tag = 'scoped memory for tpu_custom_call.1']
    #allocation5 [shape = 'u8[8192]{0}', space=vmem, size = 0x2000, scoped, tag = 'input window, operand 1']
    #allocation6 [shape = 's32[2]{0}', space=sflag, size = 0x8, scoped, tag = 'scoped memory for tpu_custom_call.1']
    #allocation7 [shape = 'u8[8192]{0}', space=vmem, size = 0x2000, scoped, tag = 'input window, operand 2']
    #allocation8 [shape = 'u8[8192]{0}', space=vmem, size = 0x2000, scoped, tag = 'input window, operand 3']
    #allocation9 [shape = 's32[2]{0}', space=sflag, size = 0x8, scoped, tag = 'scoped memory for tpu_custom_call.1']
    #allocation10 [shape = 'u8[16384]{0}', space=vmem, size = 0x4000, scoped, tag = 'input window, operand 4, single buffered']
    #allocation11 [shape = 'u8[16384]{0}', space=vmem, size = 0x4000, scoped, tag = 'input window, operand 6, single buffered']
    #allocation12 [shape = 's32[1]{0}', space=sflag, size = 0x4, scoped, tag = 'scoped memory for tpu_custom_call.1']
    #allocation13 [shape = 'u8[16384]{0}', space=vmem, size = 0x4000, scoped, tag = 'input window, operand 8, single buffered']
    #allocation14 [shape = 'u8[16384]{0}', space=vmem, size = 0x4000, scoped, tag = 'input window, operand 10, single buffered']
    #allocation15 [shape = 's32[1]{0}', space=sflag, size = 0x4, scoped, tag = 'scoped memory for tpu_custom_call.1']
    #allocation16 [shape = 'u8[8192]{0}', space=vmem, size = 0x2000, scoped, tag = 'output window, operand 0']
    #allocation17 [shape = 'u8[32768]{0}', space=vmem, size = 0x8000, scoped, tag = 'output window, operand 1']
    #allocation18 [shape = 's32[2]{0}', space=sflag, size = 0x8, scoped, tag = 'scoped memory for tpu_custom_call.1']
    %21 = vsyncpa [#allocation3], 0
    %s22 = scalar_lea.sflag [#allocation3], 1
    %23 = vsyncpa %s22, 0
    %24 = vsyncpa [#allocation6], 0
    %s25 = scalar_lea.sflag [#allocation6], 1
    %26 = vsyncpa %s25, 0
    %27 = vsyncpa [#allocation9], 0
    %s28 = scalar_lea.sflag [#allocation9], 1
    %29 = vsyncpa %s28, 0
    %30 = vsyncpa [#allocation12], 0
    %31 = vsyncpa [#allocation15], 0
    %32 = vsyncpa [#allocation4], 0
    %s33 = scalar_lea.sflag [#allocation4], 1
    %34 = vsyncpa %s33, 0
    %35 = vsyncpa [#allocation18], 0
    %s36 = scalar_lea.sflag [#allocation18], 1
    %37 = vsyncpa %s36, 0
    loop: start=0, step=1, limit=4
    $region2: #{tpu_custom_call.1} parent=1 // loop_pre_header
      _
    $region3: #{tpu_custom_call.1} parent=1 // loop_header
      %s39 = sphi 0, %s43
      %p40 = scmp.ge.s32.totalorder %s39, 4
      %s49 = sphi 0, %s51
      %s52 = sphi 0, %s49
      %s53 = sphi 0, %s52
      %s69 = sphi 0, %s53
      %s75 = sphi 0, %s77
      %s78 = sphi 0, %s75
      %s79 = sphi 0, %s78
      %s95 = sphi 0, %s79
      %s101 = sphi 0, %s103
      %s104 = sphi 0, %s101
      %s105 = sphi 0, %s104
      %s121 = sphi 0, %s105
      %s127 = sphi 0, %s129
      %s130 = sphi 0, %s127
      %s131 = sphi 0, %s130
      %s147 = sphi 0, %s131
      %s151 = sphi 0, %s151
      %s153 = sphi 0, %s151
      %s154 = sphi 0, %s153
      %s168 = sphi 0, %s154
      %s172 = sphi 0, %s172
      %s174 = sphi 0, %s172
      %s175 = sphi 0, %s174
      %s189 = sphi 0, %s175
      %s193 = sphi 0, %s193
      %s195 = sphi 0, %s193
      %s196 = sphi 0, %s195
      %s210 = sphi 0, %s196
      %s214 = sphi 0, %s214
      %s216 = sphi 0, %s214
      %s217 = sphi 0, %s216
      %s231 = sphi 0, %s217
      %s235 = sphi 0, %s235
      %s237 = sphi 0, %s235
      %s238 = sphi 0, %s237
      %s252 = sphi 0, %s238
      %s256 = sphi 0, %s256
      %s258 = sphi 0, %s256
      %s259 = sphi 0, %s258
      %s273 = sphi 0, %s259
      %s277 = sphi 0, %s277
      %s279 = sphi 0, %s277
      %s280 = sphi 0, %s279
      %s294 = sphi 0, %s280
      %s298 = sphi 0, %s298
      %s300 = sphi 0, %s298
      %s301 = sphi 0, %s300
      %s315 = sphi 0, %s301
      %s319 = sphi 0, %s319
      %s321 = sphi 0, %s319
      %s322 = sphi 0, %s321
      %s336 = sphi 0, %s322
      %s340 = sphi 0, %s340
      %s342 = sphi 0, %s340
      %s343 = sphi 0, %s342
      %s357 = sphi 0, %s343
      %s363 = sphi 0, %s365
      %s366 = sphi 0, %s363
      %s367 = sphi 0, %s366
      %s383 = sphi 0, %s367
      %s389 = sphi 0, %s391
      %s392 = sphi 0, %s389
      %s393 = sphi 0, %s392
      %s409 = sphi 0, %s393
    $region4: #{tpu_custom_call.1} parent=1 // loop_header_branch
      %42 = sbr.rel (%p40) target = $region8
    $region5: #{tpu_custom_call.1} parent=1 // loop_body
      %s44 = ssub.s32 %s39, 1
      %s45 = ssub.s32 %s39, 2
      %s46 = sadd.s32 %s39, 1
      %s47 = ssub.s32 %s39, %s46
      %p48 = scmp.eq.s32.totalorder %s47, 0
      %s50 = sadd.s32 %s49, 1
      %s51 = scalar_select %p48, %s49, %s50
      %p54 = pneg %p48
      %p55 = scmp.eq.s32.totalorder %s39, 1
      %p56 = por %p54, %p55
      %p57 = scmp.ne.s32.totalorder %s49, %s52
      %p58 = scmp.eq.s32.totalorder %s39, 0
      %p59 = por %p57, %p58
      %p60 = scmp.ne.s32.totalorder %s49, %s52
      %p61 = scmp.eq.s32.totalorder %s44, 1
      %p62 = por %p60, %p61
      %p63 = scmp.ne.s32.totalorder %s52, %s53
      %p64 = scmp.eq.s32.totalorder %s44, 0
      %p65 = por %p63, %p64
      %p66 = scmp.ne.s32.totalorder %s52, %s53
      %p67 = scmp.eq.s32.totalorder %s45, 1
      %p68 = por %p66, %p67
      %p70 = scmp.ne.s32.totalorder %s53, %s69
      %p71 = scmp.eq.s32.totalorder %s45, 0
      %p72 = por %p70, %p71
      %s73 = ssub.s32 %s39, %s46
      %p74 = scmp.eq.s32.totalorder %s73, 0
      %s76 = sadd.s32 %s75, 1
      %s77 = scalar_select %p74, %s75, %s76
      %p80 = pneg %p74
      %p81 = scmp.eq.s32.totalorder %s39, 1
      %p82 = por %p80, %p81
      %p83 = scmp.ne.s32.totalorder %s75, %s78
      %p84 = scmp.eq.s32.totalorder %s39, 0
      %p85 = por %p83, %p84
      %p86 = scmp.ne.s32.totalorder %s75, %s78
      %p87 = scmp.eq.s32.totalorder %s44, 1
      %p88 = por %p86, %p87
      %p89 = scmp.ne.s32.totalorder %s78, %s79
      %p90 = scmp.eq.s32.totalorder %s44, 0
      %p91 = por %p89, %p90
      %p92 = scmp.ne.s32.totalorder %s78, %s79
      %p93 = scmp.eq.s32.totalorder %s45, 1
      %p94 = por %p92, %p93
      %p96 = scmp.ne.s32.totalorder %s79, %s95
      %p97 = scmp.eq.s32.totalorder %s45, 0
      %p98 = por %p96, %p97
      %s99 = ssub.s32 %s39, %s46
      %p100 = scmp.eq.s32.totalorder %s99, 0
      %s102 = sadd.s32 %s101, 1
      %s103 = scalar_select %p100, %s101, %s102
      %p106 = pneg %p100
      %p107 = scmp.eq.s32.totalorder %s39, 1
      %p108 = por %p106, %p107
      %p109 = scmp.ne.s32.totalorder %s101, %s104
      %p110 = scmp.eq.s32.totalorder %s39, 0
      %p111 = por %p109, %p110
      %p112 = scmp.ne.s32.totalorder %s101, %s104
      %p113 = scmp.eq.s32.totalorder %s44, 1
      %p114 = por %p112, %p113
      %p115 = scmp.ne.s32.totalorder %s104, %s105
      %p116 = scmp.eq.s32.totalorder %s44, 0
      %p117 = por %p115, %p116
      %p118 = scmp.ne.s32.totalorder %s104, %s105
      %p119 = scmp.eq.s32.totalorder %s45, 1
      %p120 = por %p118, %p119
      %p122 = scmp.ne.s32.totalorder %s105, %s121
      %p123 = scmp.eq.s32.totalorder %s45, 0
      %p124 = por %p122, %p123
      %s125 = ssub.s32 %s39, %s46
      %p126 = scmp.eq.s32.totalorder %s125, 0
      %s128 = sadd.s32 %s127, 1
      %s129 = scalar_select %p126, %s127, %s128
      %p132 = pneg %p126
      %p133 = scmp.eq.s32.totalorder %s39, 1
      %p134 = por %p132, %p133
      %p135 = scmp.ne.s32.totalorder %s127, %s130
      %p136 = scmp.eq.s32.totalorder %s39, 0
      %p137 = por %p135, %p136
      %p138 = scmp.ne.s32.totalorder %s127, %s130
      %p139 = scmp.eq.s32.totalorder %s44, 1
      %p140 = por %p138, %p139
      %p141 = scmp.ne.s32.totalorder %s130, %s131
      %p142 = scmp.eq.s32.totalorder %s44, 0
      %p143 = por %p141, %p142
      %p144 = scmp.ne.s32.totalorder %s130, %s131
      %p145 = scmp.eq.s32.totalorder %s45, 1
      %p146 = por %p144, %p145
      %p148 = scmp.ne.s32.totalorder %s131, %s147
      %p149 = scmp.eq.s32.totalorder %s45, 0
      %p150 = por %p148, %p149
      %s152 = sadd.s32 %s151, 1
      %p155 = scmp.eq.s32.totalorder %s39, 1
      %p156 = scmp.ne.s32.totalorder %s151, %s153
      %p157 = scmp.eq.s32.totalorder %s39, 0
      %p158 = por %p156, %p157
      %p159 = scmp.ne.s32.totalorder %s151, %s153
      %p160 = scmp.eq.s32.totalorder %s44, 1
      %p161 = por %p159, %p160
      %p162 = scmp.ne.s32.totalorder %s153, %s154
      %p163 = scmp.eq.s32.totalorder %s44, 0
      %p164 = por %p162, %p163
      %p165 = scmp.ne.s32.totalorder %s153, %s154
      %p166 = scmp.eq.s32.totalorder %s45, 1
      %p167 = por %p165, %p166
      %p169 = scmp.ne.s32.totalorder %s154, %s168
      %p170 = scmp.eq.s32.totalorder %s45, 0
      %p171 = por %p169, %p170
      %s173 = sadd.s32 %s172, 1
      %p176 = scmp.eq.s32.totalorder %s39, 1
      %p177 = scmp.ne.s32.totalorder %s172, %s174
      %p178 = scmp.eq.s32.totalorder %s39, 0
      %p179 = por %p177, %p178
      %p180 = scmp.ne.s32.totalorder %s172, %s174
      %p181 = scmp.eq.s32.totalorder %s44, 1
      %p182 = por %p180, %p181
      %p183 = scmp.ne.s32.totalorder %s174, %s175
      %p184 = scmp.eq.s32.totalorder %s44, 0
      %p185 = por %p183, %p184
      %p186 = scmp.ne.s32.totalorder %s174, %s175
      %p187 = scmp.eq.s32.totalorder %s45, 1
      %p188 = por %p186, %p187
      %p190 = scmp.ne.s32.totalorder %s175, %s189
      %p191 = scmp.eq.s32.totalorder %s45, 0
      %p192 = por %p190, %p191
      %s194 = sadd.s32 %s193, 1
      %p197 = scmp.eq.s32.totalorder %s39, 1
      %p198 = scmp.ne.s32.totalorder %s193, %s195
      %p199 = scmp.eq.s32.totalorder %s39, 0
      %p200 = por %p198, %p199
      %p201 = scmp.ne.s32.totalorder %s193, %s195
      %p202 = scmp.eq.s32.totalorder %s44, 1
      %p203 = por %p201, %p202
      %p204 = scmp.ne.s32.totalorder %s195, %s196
      %p205 = scmp.eq.s32.totalorder %s44, 0
      %p206 = por %p204, %p205
      %p207 = scmp.ne.s32.totalorder %s195, %s196
      %p208 = scmp.eq.s32.totalorder %s45, 1
      %p209 = por %p207, %p208
      %p211 = scmp.ne.s32.totalorder %s196, %s210
      %p212 = scmp.eq.s32.totalorder %s45, 0
      %p213 = por %p211, %p212
      %s215 = sadd.s32 %s214, 1
      %p218 = scmp.eq.s32.totalorder %s39, 1
      %p219 = scmp.ne.s32.totalorder %s214, %s216
      %p220 = scmp.eq.s32.totalorder %s39, 0
      %p221 = por %p219, %p220
      %p222 = scmp.ne.s32.totalorder %s214, %s216
      %p223 = scmp.eq.s32.totalorder %s44, 1
      %p224 = por %p222, %p223
      %p225 = scmp.ne.s32.totalorder %s216, %s217
      %p226 = scmp.eq.s32.totalorder %s44, 0
      %p227 = por %p225, %p226
      %p228 = scmp.ne.s32.totalorder %s216, %s217
      %p229 = scmp.eq.s32.totalorder %s45, 1
      %p230 = por %p228, %p229
      %p232 = scmp.ne.s32.totalorder %s217, %s231
      %p233 = scmp.eq.s32.totalorder %s45, 0
      %p234 = por %p232, %p233
      %s236 = sadd.s32 %s235, 1
      %p239 = scmp.eq.s32.totalorder %s39, 1
      %p240 = scmp.ne.s32.totalorder %s235, %s237
      %p241 = scmp.eq.s32.totalorder %s39, 0
      %p242 = por %p240, %p241
      %p243 = scmp.ne.s32.totalorder %s235, %s237
      %p244 = scmp.eq.s32.totalorder %s44, 1
      %p245 = por %p243, %p244
      %p246 = scmp.ne.s32.totalorder %s237, %s238
      %p247 = scmp.eq.s32.totalorder %s44, 0
      %p248 = por %p246, %p247
      %p249 = scmp.ne.s32.totalorder %s237, %s238
      %p250 = scmp.eq.s32.totalorder %s45, 1
      %p251 = por %p249, %p250
      %p253 = scmp.ne.s32.totalorder %s238, %s252
      %p254 = scmp.eq.s32.totalorder %s45, 0
      %p255 = por %p253, %p254
      %s257 = sadd.s32 %s256, 1
      %p260 = scmp.eq.s32.totalorder %s39, 1
      %p261 = scmp.ne.s32.totalorder %s256, %s258
      %p262 = scmp.eq.s32.totalorder %s39, 0
      %p263 = por %p261, %p262
      %p264 = scmp.ne.s32.totalorder %s256, %s258
      %p265 = scmp.eq.s32.totalorder %s44, 1
      %p266 = por %p264, %p265
      %p267 = scmp.ne.s32.totalorder %s258, %s259
      %p268 = scmp.eq.s32.totalorder %s44, 0
      %p269 = por %p267, %p268
      %p270 = scmp.ne.s32.totalorder %s258, %s259
      %p271 = scmp.eq.s32.totalorder %s45, 1
      %p272 = por %p270, %p271
      %p274 = scmp.ne.s32.totalorder %s259, %s273
      %p275 = scmp.eq.s32.totalorder %s45, 0
      %p276 = por %p274, %p275
      %s278 = sadd.s32 %s277, 1
      %p281 = scmp.eq.s32.totalorder %s39, 1
      %p282 = scmp.ne.s32.totalorder %s277, %s279
      %p283 = scmp.eq.s32.totalorder %s39, 0
      %p284 = por %p282, %p283
      %p285 = scmp.ne.s32.totalorder %s277, %s279
      %p286 = scmp.eq.s32.totalorder %s44, 1
      %p287 = por %p285, %p286
      %p288 = scmp.ne.s32.totalorder %s279, %s280
      %p289 = scmp.eq.s32.totalorder %s44, 0
      %p290 = por %p288, %p289
      %p291 = scmp.ne.s32.totalorder %s279, %s280
      %p292 = scmp.eq.s32.totalorder %s45, 1
      %p293 = por %p291, %p292
      %p295 = scmp.ne.s32.totalorder %s280, %s294
      %p296 = scmp.eq.s32.totalorder %s45, 0
      %p297 = por %p295, %p296
      %s299 = sadd.s32 %s298, 1
      %p302 = scmp.eq.s32.totalorder %s39, 1
      %p303 = scmp.ne.s32.totalorder %s298, %s300
      %p304 = scmp.eq.s32.totalorder %s39, 0
      %p305 = por %p303, %p304
      %p306 = scmp.ne.s32.totalorder %s298, %s300
      %p307 = scmp.eq.s32.totalorder %s44, 1
      %p308 = por %p306, %p307
      %p309 = scmp.ne.s32.totalorder %s300, %s301
      %p310 = scmp.eq.s32.totalorder %s44, 0
      %p311 = por %p309, %p310
      %p312 = scmp.ne.s32.totalorder %s300, %s301
      %p313 = scmp.eq.s32.totalorder %s45, 1
      %p314 = por %p312, %p313
      %p316 = scmp.ne.s32.totalorder %s301, %s315
      %p317 = scmp.eq.s32.totalorder %s45, 0
      %p318 = por %p316, %p317
      %s320 = sadd.s32 %s319, 1
      %p323 = scmp.eq.s32.totalorder %s39, 1
      %p324 = scmp.ne.s32.totalorder %s319, %s321
      %p325 = scmp.eq.s32.totalorder %s39, 0
      %p326 = por %p324, %p325
      %p327 = scmp.ne.s32.totalorder %s319, %s321
      %p328 = scmp.eq.s32.totalorder %s44, 1
      %p329 = por %p327, %p328
      %p330 = scmp.ne.s32.totalorder %s321, %s322
      %p331 = scmp.eq.s32.totalorder %s44, 0
      %p332 = por %p330, %p331
      %p333 = scmp.ne.s32.totalorder %s321, %s322
      %p334 = scmp.eq.s32.totalorder %s45, 1
      %p335 = por %p333, %p334
      %p337 = scmp.ne.s32.totalorder %s322, %s336
      %p338 = scmp.eq.s32.totalorder %s45, 0
      %p339 = por %p337, %p338
      %s341 = sadd.s32 %s340, 1
      %p344 = scmp.eq.s32.totalorder %s39, 1
      %p345 = scmp.ne.s32.totalorder %s340, %s342
      %p346 = scmp.eq.s32.totalorder %s39, 0
      %p347 = por %p345, %p346
      %p348 = scmp.ne.s32.totalorder %s340, %s342
      %p349 = scmp.eq.s32.totalorder %s44, 1
      %p350 = por %p348, %p349
      %p351 = scmp.ne.s32.totalorder %s342, %s343
      %p352 = scmp.eq.s32.totalorder %s44, 0
      %p353 = por %p351, %p352
      %p354 = scmp.ne.s32.totalorder %s342, %s343
      %p355 = scmp.eq.s32.totalorder %s45, 1
      %p356 = por %p354, %p355
      %p358 = scmp.ne.s32.totalorder %s343, %s357
      %p359 = scmp.eq.s32.totalorder %s45, 0
      %p360 = por %p358, %p359
      %s361 = ssub.s32 %s39, %s46
      %p362 = scmp.eq.s32.totalorder %s361, 0
      %s364 = sadd.s32 %s363, 1
      %s365 = scalar_select %p362, %s363, %s364
      %p368 = pneg %p362
      %p369 = scmp.eq.s32.totalorder %s39, 1
      %p370 = por %p368, %p369
      %p371 = scmp.ne.s32.totalorder %s363, %s366
      %p372 = scmp.eq.s32.totalorder %s39, 0
      %p373 = por %p371, %p372
      %p374 = scmp.ne.s32.totalorder %s363, %s366
      %p375 = scmp.eq.s32.totalorder %s44, 1
      %p376 = por %p374, %p375
      %p377 = scmp.ne.s32.totalorder %s366, %s367
      %p378 = scmp.eq.s32.totalorder %s44, 0
      %p379 = por %p377, %p378
      %p380 = scmp.ne.s32.totalorder %s366, %s367
      %p381 = scmp.eq.s32.totalorder %s45, 1
      %p382 = por %p380, %p381
      %p384 = scmp.ne.s32.totalorder %s367, %s383
      %p385 = scmp.eq.s32.totalorder %s45, 0
      %p386 = por %p384, %p385
      %s387 = ssub.s32 %s39, %s46
      %p388 = scmp.eq.s32.totalorder %s387, 0
      %s390 = sadd.s32 %s389, 1
      %s391 = scalar_select %p388, %s389, %s390
      %p394 = pneg %p388
      %p395 = scmp.eq.s32.totalorder %s39, 1
      %p396 = por %p394, %p395
      %p397 = scmp.ne.s32.totalorder %s389, %s392
      %p398 = scmp.eq.s32.totalorder %s39, 0
      %p399 = por %p397, %p398
      %p400 = scmp.ne.s32.totalorder %s389, %s392
      %p401 = scmp.eq.s32.totalorder %s44, 1
      %p402 = por %p400, %p401
      %p403 = scmp.ne.s32.totalorder %s392, %s393
      %p404 = scmp.eq.s32.totalorder %s44, 0
      %p405 = por %p403, %p404
      %p406 = scmp.ne.s32.totalorder %s392, %s393
      %p407 = scmp.eq.s32.totalorder %s45, 1
      %p408 = por %p406, %p407
      %p410 = scmp.ne.s32.totalorder %s393, %s409
      %p411 = scmp.eq.s32.totalorder %s45, 0
      %p412 = por %p410, %p411
      %p413 = scmp.le.s32.totalorder 1, %s39
      %p414 = scmp.lt.s32.totalorder %s39, 3
      %p415 = pnand %p413, %p414
      %p416 = pneg %p415
      // Predicated region
      $region9: #{tpu_custom_call.1} parent=5 // pred_check
        _
      $region10: #{tpu_custom_call.1} parent=5 // pred_check_branch
        %418 = sbr.rel (%p415) target = $region12
      $region11: #{tpu_custom_call.1} parent=5 // pred_region
        %s419 = ssub.s32 %s39, 1
        // Predicated region
        $region13: #{tpu_custom_call.1} parent=11 // pred_check
          %p420 = pneg %p164
        $region14: #{tpu_custom_call.1} parent=11 // pred_check_branch
          %422 = sbr.rel (%p420) target = $region16
        $region15: #{tpu_custom_call.1} parent=11 // pred_region
          %424 = vsyncadd [#allocation9], 0
          %s425 = sshll.u32 %s4, 4
          %s426 = int_to_ptr.hbm [resolvable:$true] %s425
          %s427 = sshll.u32 [#allocation10], 4
          %s428 = int_to_ptr.vmem [resolvable:$true] %s427
          %433 = dma.hbm_to_vmem [thread:$0]  %s426, 512, %s428, [#allocation9], 128, 128, 8
        $region16: #{tpu_custom_call.1} parent=11 // pred_fallthru
          _
        // Predicated region
        $region17: #{tpu_custom_call.1} parent=11 // pred_check
          %p434 = pneg %p185
        $region18: #{tpu_custom_call.1} parent=11 // pred_check_branch
          %436 = sbr.rel (%p434) target = $region20
        $region19: #{tpu_custom_call.1} parent=11 // pred_region
          _
        $region20: #{tpu_custom_call.1} parent=11 // pred_fallthru
          _
        // Predicated region
        $region21: #{tpu_custom_call.1} parent=11 // pred_check
          %p437 = pneg %p206
        $region22: #{tpu_custom_call.1} parent=11 // pred_check_branch
          %439 = sbr.rel (%p437) target = $region24
        $region23: #{tpu_custom_call.1} parent=11 // pred_region
          %441 = vsyncadd [#allocation12], 0
          %s442 = sshll.u32 %s6, 4
          %s443 = int_to_ptr.hbm [resolvable:$true] %s442
          %s444 = sshll.u32 [#allocation11], 4
          %s445 = int_to_ptr.vmem [resolvable:$true] %s444
          %450 = dma.hbm_to_vmem [thread:$0]  %s443, 512, %s445, [#allocation12], 128, 128, 8
        $region24: #{tpu_custom_call.1} parent=11 // pred_fallthru
          _
        // Predicated region
        $region25: #{tpu_custom_call.1} parent=11 // pred_check
          %p451 = pneg %p227
        $region26: #{tpu_custom_call.1} parent=11 // pred_check_branch
          %453 = sbr.rel (%p451) target = $region28
        $region27: #{tpu_custom_call.1} parent=11 // pred_region
          _
        $region28: #{tpu_custom_call.1} parent=11 // pred_fallthru
          _
        // Predicated region
        $region29: #{tpu_custom_call.1} parent=11 // pred_check
          %p454 = pneg %p248
        $region30: #{tpu_custom_call.1} parent=11 // pred_check_branch
          %456 = sbr.rel (%p454) target = $region32
        $region31: #{tpu_custom_call.1} parent=11 // pred_region
          %458 = vsyncadd [#allocation12], 0
          %s459 = sshll.u32 %s8, 4
          %s460 = int_to_ptr.hbm [resolvable:$true] %s459
          %s461 = sshll.u32 [#allocation13], 4
          %s462 = int_to_ptr.vmem [resolvable:$true] %s461
          %467 = dma.hbm_to_vmem [thread:$0]  %s460, 512, %s462, [#allocation12], 128, 128, 8
        $region32: #{tpu_custom_call.1} parent=11 // pred_fallthru
          _
        // Predicated region
        $region33: #{tpu_custom_call.1} parent=11 // pred_check
          %p468 = pneg %p269
        $region34: #{tpu_custom_call.1} parent=11 // pred_check_branch
          %470 = sbr.rel (%p468) target = $region36
        $region35: #{tpu_custom_call.1} parent=11 // pred_region
          _
        $region36: #{tpu_custom_call.1} parent=11 // pred_fallthru
          _
        // Predicated region
        $region37: #{tpu_custom_call.1} parent=11 // pred_check
          %p471 = pneg %p290
        $region38: #{tpu_custom_call.1} parent=11 // pred_check_branch
          %473 = sbr.rel (%p471) target = $region40
        $region39: #{tpu_custom_call.1} parent=11 // pred_region
          %475 = vsyncadd [#allocation15], 0
          %s476 = sshll.u32 %s10, 4
          %s477 = int_to_ptr.hbm [resolvable:$true] %s476
          %s478 = sshll.u32 [#allocation14], 4
          %s479 = int_to_ptr.vmem [resolvable:$true] %s478
          %484 = dma.hbm_to_vmem [thread:$0]  %s477, 512, %s479, [#allocation15], 128, 128, 8
        $region40: #{tpu_custom_call.1} parent=11 // pred_fallthru
          _
        // Predicated region
        $region41: #{tpu_custom_call.1} parent=11 // pred_check
          %p485 = pneg %p311
        $region42: #{tpu_custom_call.1} parent=11 // pred_check_branch
          %487 = sbr.rel (%p485) target = $region44
        $region43: #{tpu_custom_call.1} parent=11 // pred_region
          _
        $region44: #{tpu_custom_call.1} parent=11 // pred_fallthru
          _
        // Predicated region
        $region45: #{tpu_custom_call.1} parent=11 // pred_check
          %p488 = pneg %p332
        $region46: #{tpu_custom_call.1} parent=11 // pred_check_branch
          %490 = sbr.rel (%p488) target = $region48
        $region47: #{tpu_custom_call.1} parent=11 // pred_region
          _
        $region48: #{tpu_custom_call.1} parent=11 // pred_fallthru
          _
        // Predicated region
        $region49: #{tpu_custom_call.1} parent=11 // pred_check
          %p491 = pneg %p353
        $region50: #{tpu_custom_call.1} parent=11 // pred_check_branch
          %493 = sbr.rel (%p491) target = $region52
        $region51: #{tpu_custom_call.1} parent=11 // pred_region
          _
        $region52: #{tpu_custom_call.1} parent=11 // pred_fallthru
          _
      $region12: #{tpu_custom_call.1} parent=5 // pred_fallthru
        _
      %p494 = scmp.lt.s32.totalorder %s39, 2
      // Predicated region
      $region53: #{tpu_custom_call.1} parent=5 // pred_check
        %p495 = pneg %p494
      $region54: #{tpu_custom_call.1} parent=5 // pred_check_branch
        %497 = sbr.rel (%p495) target = $region56
      $region55: #{tpu_custom_call.1} parent=5 // pred_region
        // Predicated region
        $region57: #{tpu_custom_call.1} parent=55 // pred_check
          %p498 = pneg %p59
        $region58: #{tpu_custom_call.1} parent=55 // pred_check_branch
          %500 = sbr.rel (%p498) target = $region60
        $region59: #{tpu_custom_call.1} parent=55 // pred_region
          %s501 = sand.u32 %s49, 1
          %s502 = scalar_lea.sflag [#allocation3], %s501
          %s503 = sand.u32 %s49, 1
          %s504 = smul.addr %s503, 8
          %s505 = scalar_lea.vmem [#allocation2], %s504
          %507 = vsyncadd %s502, 0
          %s508 = smul.addr %s39, 8
          %s509 = scalar_lea.hbm %s0, %s508
          %s511 = sshll.u32 %s509, 4
          %s512 = int_to_ptr.hbm [resolvable:$true] %s511
          %s513 = sshll.u32 %s505, 4
          %s514 = int_to_ptr.vmem [resolvable:$true] %s513
          %516 = dma.hbm_to_vmem [thread:$0]  %s512, 128, %s514, %s502
        $region60: #{tpu_custom_call.1} parent=55 // pred_fallthru
          _
        // Predicated region
        $region61: #{tpu_custom_call.1} parent=55 // pred_check
          %p517 = pneg %p85
        $region62: #{tpu_custom_call.1} parent=55 // pred_check_branch
          %519 = sbr.rel (%p517) target = $region64
        $region63: #{tpu_custom_call.1} parent=55 // pred_region
          %s520 = sand.u32 %s39, 1
          %s521 = scalar_lea.sflag [#allocation6], %s520
          %s522 = sand.u32 %s75, 1
          %s523 = smul.addr %s522, 8
          %s524 = scalar_lea.vmem [#allocation5], %s523
          %526 = vsyncadd %s521, 0
          %s527 = smul.addr %s39, 8
          %s528 = scalar_lea.hbm %s1, %s527
          %s530 = sshll.u32 %s528, 4
          %s531 = int_to_ptr.hbm [resolvable:$true] %s530
          %s532 = sshll.u32 %s524, 4
          %s533 = int_to_ptr.vmem [resolvable:$true] %s532
          %535 = dma.hbm_to_vmem [thread:$0]  %s531, 128, %s533, %s521
        $region64: #{tpu_custom_call.1} parent=55 // pred_fallthru
          _
        // Predicated region
        $region65: #{tpu_custom_call.1} parent=55 // pred_check
          %p536 = pneg %p111
        $region66: #{tpu_custom_call.1} parent=55 // pred_check_branch
          %538 = sbr.rel (%p536) target = $region68
        $region67: #{tpu_custom_call.1} parent=55 // pred_region
          %s539 = sand.u32 %s39, 1
          %s540 = scalar_lea.sflag [#allocation6], %s539
          %s541 = sand.u32 %s101, 1
          %s542 = smul.addr %s541, 8
          %s543 = scalar_lea.vmem [#allocation7], %s542
          %545 = vsyncadd %s540, 0
          %s546 = smul.addr %s39, 8
          %s547 = scalar_lea.hbm %s2, %s546
          %s549 = sshll.u32 %s547, 4
          %s550 = int_to_ptr.hbm [resolvable:$true] %s549
          %s551 = sshll.u32 %s543, 4
          %s552 = int_to_ptr.vmem [resolvable:$true] %s551
          %554 = dma.hbm_to_vmem [thread:$0]  %s550, 128, %s552, %s540
        $region68: #{tpu_custom_call.1} parent=55 // pred_fallthru
          _
        // Predicated region
        $region69: #{tpu_custom_call.1} parent=55 // pred_check
          %p555 = pneg %p137
        $region70: #{tpu_custom_call.1} parent=55 // pred_check_branch
          %557 = sbr.rel (%p555) target = $region72
        $region71: #{tpu_custom_call.1} parent=55 // pred_region
          %s558 = sand.u32 %s39, 1
          %s559 = scalar_lea.sflag [#allocation9], %s558
          %s560 = sand.u32 %s127, 1
          %s561 = smul.addr %s560, 8
          %s562 = scalar_lea.vmem [#allocation8], %s561
          %564 = vsyncadd %s559, 0
          %s565 = smul.addr %s39, 8
          %s566 = scalar_lea.hbm %s3, %s565
          %s568 = sshll.u32 %s566, 4
          %s569 = int_to_ptr.hbm [resolvable:$true] %s568
          %s570 = sshll.u32 %s562, 4
          %s571 = int_to_ptr.vmem [resolvable:$true] %s570
          %573 = dma.hbm_to_vmem [thread:$0]  %s569, 128, %s571, %s559
        $region72: #{tpu_custom_call.1} parent=55 // pred_fallthru
          _
      $region56: #{tpu_custom_call.1} parent=5 // pred_fallthru
        _
      %p574 = scmp.le.s32.totalorder 1, %s39
      %p575 = scmp.lt.s32.totalorder %s39, 3
      %p576 = pnand %p574, %p575
      %p577 = pneg %p576
      // Predicated region
      $region73: #{tpu_custom_call.1} parent=5 // pred_check
        _
      $region74: #{tpu_custom_call.1} parent=5 // pred_check_branch
        %579 = sbr.rel (%p576) target = $region76
      $region75: #{tpu_custom_call.1} parent=5 // pred_region
        %s580 = ssub.s32 %s39, 1
        %s581 = sand.u32 %s52, 1
        %s582 = scalar_lea.sflag [#allocation3], %s581
        %s583 = sand.u32 %s52, 1
        %s584 = smul.addr %s583, 8
        %s585 = scalar_lea.vmem [#allocation2], %s584
        // Predicated region
        $region77: #{tpu_custom_call.1} parent=75 // pred_check
          %p586 = pneg %p65
        $region78: #{tpu_custom_call.1} parent=75 // pred_check_branch
          %588 = sbr.rel (%p586) target = $region80
        $region79: #{tpu_custom_call.1} parent=75 // pred_region
          %590 = dma.done %s582, 128
        $region80: #{tpu_custom_call.1} parent=75 // pred_fallthru
          _
        %s591 = sand.u32 %s44, 1
        %s592 = scalar_lea.sflag [#allocation6], %s591
        %s593 = sand.u32 %s78, 1
        %s594 = smul.addr %s593, 8
        %s595 = scalar_lea.vmem [#allocation5], %s594
        // Predicated region
        $region81: #{tpu_custom_call.1} parent=75 // pred_check
          %p596 = pneg %p91
        $region82: #{tpu_custom_call.1} parent=75 // pred_check_branch
          %598 = sbr.rel (%p596) target = $region84
        $region83: #{tpu_custom_call.1} parent=75 // pred_region
          %600 = dma.done %s592, 128
        $region84: #{tpu_custom_call.1} parent=75 // pred_fallthru
          _
        %s601 = sand.u32 %s44, 1
        %s602 = scalar_lea.sflag [#allocation6], %s601
        %s603 = sand.u32 %s104, 1
        %s604 = smul.addr %s603, 8
        %s605 = scalar_lea.vmem [#allocation7], %s604
        // Predicated region
        $region85: #{tpu_custom_call.1} parent=75 // pred_check
          %p606 = pneg %p117
        $region86: #{tpu_custom_call.1} parent=75 // pred_check_branch
          %608 = sbr.rel (%p606) target = $region88
        $region87: #{tpu_custom_call.1} parent=75 // pred_region
          %610 = dma.done %s602, 128
        $region88: #{tpu_custom_call.1} parent=75 // pred_fallthru
          _
        %s611 = sand.u32 %s44, 1
        %s612 = scalar_lea.sflag [#allocation9], %s611
        %s613 = sand.u32 %s130, 1
        %s614 = smul.addr %s613, 8
        %s615 = scalar_lea.vmem [#allocation8], %s614
        // Predicated region
        $region89: #{tpu_custom_call.1} parent=75 // pred_check
          %p616 = pneg %p143
        $region90: #{tpu_custom_call.1} parent=75 // pred_check_branch
          %618 = sbr.rel (%p616) target = $region92
        $region91: #{tpu_custom_call.1} parent=75 // pred_region
          %620 = dma.done %s612, 128
        $region92: #{tpu_custom_call.1} parent=75 // pred_fallthru
          _
        // Predicated region
        $region93: #{tpu_custom_call.1} parent=75 // pred_check
          %p621 = pneg %p164
        $region94: #{tpu_custom_call.1} parent=75 // pred_check_branch
          %623 = sbr.rel (%p621) target = $region96
        $region95: #{tpu_custom_call.1} parent=75 // pred_region
          %625 = dma.done [#allocation9], 512
        $region96: #{tpu_custom_call.1} parent=75 // pred_fallthru
          _
        // Predicated region
        $region97: #{tpu_custom_call.1} parent=75 // pred_check
          %p626 = pneg %p206
        $region98: #{tpu_custom_call.1} parent=75 // pred_check_branch
          %628 = sbr.rel (%p626) target = $region100
        $region99: #{tpu_custom_call.1} parent=75 // pred_region
          %630 = dma.done [#allocation12], 512
        $region100: #{tpu_custom_call.1} parent=75 // pred_fallthru
          _
        // Predicated region
        $region101: #{tpu_custom_call.1} parent=75 // pred_check
          %p631 = pneg %p248
        $region102: #{tpu_custom_call.1} parent=75 // pred_check_branch
          %633 = sbr.rel (%p631) target = $region104
        $region103: #{tpu_custom_call.1} parent=75 // pred_region
          %635 = dma.done [#allocation12], 512
        $region104: #{tpu_custom_call.1} parent=75 // pred_fallthru
          _
        // Predicated region
        $region105: #{tpu_custom_call.1} parent=75 // pred_check
          %p636 = pneg %p290
        $region106: #{tpu_custom_call.1} parent=75 // pred_check_branch
          %638 = sbr.rel (%p636) target = $region108
        $region107: #{tpu_custom_call.1} parent=75 // pred_region
          %640 = dma.done [#allocation15], 512
        $region108: #{tpu_custom_call.1} parent=75 // pred_fallthru
          _
        %s641 = sand.u32 %s52, 1
        %s642 = scalar_lea.sflag [#allocation3], %s641
        %s643 = sand.u32 %s52, 1
        %s644 = smul.addr %s643, 8
        %s645 = scalar_lea.vmem [#allocation2], %s644
        %p646 = pneg %p65
        %p647 = pneg %p62
        %s648 = sand.u32 %s44, 1
        %s649 = scalar_lea.sflag [#allocation6], %s648
        %s650 = sand.u32 %s78, 1
        %s651 = smul.addr %s650, 8
        %s652 = scalar_lea.vmem [#allocation5], %s651
        %p653 = pneg %p91
        %p654 = pneg %p88
        %s655 = sand.u32 %s44, 1
        %s656 = scalar_lea.sflag [#allocation6], %s655
        %s657 = sand.u32 %s104, 1
        %s658 = smul.addr %s657, 8
        %s659 = scalar_lea.vmem [#allocation7], %s658
        %p660 = pneg %p117
        %p661 = pneg %p114
        %s662 = sand.u32 %s44, 1
        %s663 = scalar_lea.sflag [#allocation9], %s662
        %s664 = sand.u32 %s130, 1
        %s665 = smul.addr %s664, 8
        %s666 = scalar_lea.vmem [#allocation8], %s665
        %p667 = pneg %p143
        %p668 = pneg %p140
        %p669 = pneg %p164
        %p670 = pneg %p161
        %p671 = pneg %p185
        %p672 = pneg %p182
        %p673 = pneg %p206
        %p674 = pneg %p203
        %p675 = pneg %p227
        %p676 = pneg %p224
        %p677 = pneg %p248
        %p678 = pneg %p245
        %p679 = pneg %p269
        %p680 = pneg %p266
        %p681 = pneg %p290
        %p682 = pneg %p287
        %p683 = pneg %p311
        %p684 = pneg %p308
        %p685 = pneg %p332
        %p686 = pneg %p329
        %p687 = pneg %p353
        %p688 = pneg %p350
        %p689 = pneg %p379
        %p690 = pneg %p376
        %s691 = sand.u32 %s366, 1
        %s692 = scalar_lea.sflag [#allocation4], %s691
        %s693 = sand.u32 %s366, 1
        %s694 = smul.addr %s693, 8
        %s695 = scalar_lea.vmem [#allocation16], %s694
        %p696 = pneg %p405
        %p697 = pneg %p402
        %s698 = sand.u32 %s392, 1
        %s699 = scalar_lea.sflag [#allocation18], %s698
        %s700 = sand.u32 %s392, 1
        %s701 = smul.addr %s700, 32
        %s702 = scalar_lea.vmem [#allocation17], %s701
        %v703 = vld [vmem:[%s585] sm:$0xff]
        %v704 = vld [vmem:[%s595] sm:$0xff]
        %v705 = vld [vmem:[%s605] sm:$0xff]
        %v706 = vld [vmem:[#allocation10] sm:$0xff]
        %v707 = vld [vmem:[#allocation10 + $0x8] sm:$0xff]
        %v708 = vld [vmem:[#allocation10 + $0x10] sm:$0xff]
        %v709 = vld [vmem:[#allocation10 + $0x18] sm:$0xff]
        %v710 = vld [vmem:[%s5] sm:$0x1]
        %v712 = vperm.slane %v710, 0
        %vm714 = vcmask 261120
        %v716 = vsel %vm714, %v703, 0
        %718 = vmatpush.msra.mxu0 0.0
        %719 = vmatpush.msra.mxu0 0.0
        %720 = vmatpush.msra.mxu0 0.0
        %721 = vmatpush.msra.mxu0 0.0
        %722 = vmatpush.msra.mxu0 0.0
        %723 = vmatpush.msra.mxu0 0.0
        %724 = vmatpush.msra.mxu0 0.0
        %725 = vmatpush.msra.mxu0 0.0
        %726 = vmatpush.msra.mxu0 0.0
        %727 = vmatpush.msra.mxu0 0.0
        %728 = vmatpush.msra.mxu0 0.0
        %729 = vmatpush.msra.mxu0 0.0
        %730 = vmatpush.msra.mxu0 %v709
        %731 = vmatpush.msra.mxu0 %v708
        %732 = vmatpush.msra.mxu0 %v707
        %733 = vmatpush.msra.mxu0 %v706
        %734 = vmatmul.f32.gmra.mxu0 %v716
        %v735 = vpop.f32.mrf.mxu0
        %v736 = vadd.f32 %v712, %v735
        %737 = vdwg.mxu0
        %v738 = vld [vmem:[#allocation11] sm:$0xff]
        %v739 = vld [vmem:[#allocation11 + $0x8] sm:$0xff]
        %v740 = vld [vmem:[#allocation11 + $0x10] sm:$0xff]
        %v741 = vld [vmem:[#allocation11 + $0x18] sm:$0xff]
        %v742 = vld [vmem:[%s7] sm:$0x1]
        %v744 = vperm.slane %v742, 0
        %v747 = vsel %vm714, %v704, 0
        %749 = vmatpush.msra.mxu0 0.0
        %750 = vmatpush.msra.mxu0 0.0
        %751 = vmatpush.msra.mxu0 0.0
        %752 = vmatpush.msra.mxu0 0.0
        %753 = vmatpush.msra.mxu0 0.0
        %754 = vmatpush.msra.mxu0 0.0
        %755 = vmatpush.msra.mxu0 0.0
        %756 = vmatpush.msra.mxu0 0.0
        %757 = vmatpush.msra.mxu0 0.0
        %758 = vmatpush.msra.mxu0 0.0
        %759 = vmatpush.msra.mxu0 0.0
        %760 = vmatpush.msra.mxu0 0.0
        %761 = vmatpush.msra.mxu0 %v741
        %762 = vmatpush.msra.mxu0 %v740
        %763 = vmatpush.msra.mxu0 %v739
        %764 = vmatpush.msra.mxu0 %v738
        %765 = vmatmul.f32.gmra.mxu0 %v747
        %v766 = vpop.f32.mrf.mxu0
        %v767 = vadd.f32 %v744, %v766
        %768 = vdwg.mxu0
        %v769 = vld [vmem:[#allocation13] sm:$0xff]
        %v770 = vld [vmem:[#allocation13 + $0x8] sm:$0xff]
        %v771 = vld [vmem:[#allocation13 + $0x10] sm:$0xff]
        %v772 = vld [vmem:[#allocation13 + $0x18] sm:$0xff]
        %v773 = vld [vmem:[%s9] sm:$0x1]
        %v775 = vperm.slane %v773, 0
        %v778 = vsel %vm714, %v705, 0
        %780 = vmatpush.msra.mxu0 0.0
        %781 = vmatpush.msra.mxu0 0.0
        %782 = vmatpush.msra.mxu0 0.0
        %783 = vmatpush.msra.mxu0 0.0
        %784 = vmatpush.msra.mxu0 0.0
        %785 = vmatpush.msra.mxu0 0.0
        %786 = vmatpush.msra.mxu0 0.0
        %787 = vmatpush.msra.mxu0 0.0
        %788 = vmatpush.msra.mxu0 0.0
        %789 = vmatpush.msra.mxu0 0.0
        %790 = vmatpush.msra.mxu0 0.0
        %791 = vmatpush.msra.mxu0 0.0
        %792 = vmatpush.msra.mxu0 %v772
        %793 = vmatpush.msra.mxu0 %v771
        %794 = vmatpush.msra.mxu0 %v770
        %795 = vmatpush.msra.mxu0 %v769
        %796 = vmatmul.f32.gmra.mxu0 %v778
        %v797 = vpop.f32.mrf.mxu0
        %v798 = vadd.f32 %v775, %v797
        %799 = vdwg.mxu0
        %801 = vrot.lane.b32.xlu0 %v736, 120
        %v802 = vpop.permute.xlu0 %801
        %804 = vrot.lane.b32.xlu0 %v736, 112
        %v805 = vpop.permute.xlu0 %804
        %807 = vrot.lane.b32.xlu0 %v736, 104
        %v808 = vpop.permute.xlu0 %807
        %v810 = vrot.slane %v805, 4
        %vm811 = vcmask 1047556
        %v812 = vsel %vm811, %v810, %v736
        %v813 = vrot.slane %v736, 4
        %v814 = vsel %vm811, %v805, %v813
        %v816 = vunpack.c.l.s4 1983009808
        %v817 = vunpack.c.0.s8 %v816
        %v818 = vperm.slane %v812, %v817
        %v820 = vunpack.c.l.s4 1983009808
        %v821 = vunpack.c.0.s8 %v820
        %v822 = vperm.slane %v814, %v821
        %v823 = vrot.slane %v808, 4
        %v824 = vsel %vm811, %v823, %v802
        %v825 = vrot.slane %v802, 4
        %v826 = vsel %vm811, %v808, %v825
        %v828 = vunpack.c.l.s4 1983009808
        %v829 = vunpack.c.0.s8 %v828
        %v830 = vperm.slane %v824, %v829
        %v832 = vunpack.c.l.s4 1983009808
        %v833 = vunpack.c.0.s8 %v832
        %v834 = vperm.slane %v826, %v833
        %v835 = vrot.slane %v830, 4
        %v836 = vsel %vm811, %v835, %v818
        %v837 = vrot.slane %v818, 4
        %v838 = vsel %vm811, %v830, %v837
        %v840 = vunpack.c.l.s4 1934713408
        %v841 = vunpack.c.0.s8 %v840
        %v842 = vperm.slane %v836, %v841
        %v844 = vunpack.c.l.s4 1934713408
        %v845 = vunpack.c.0.s8 %v844
        %v846 = vperm.slane %v838, %v845
        %v847 = vrot.slane %v834, 4
        %v848 = vsel %vm811, %v847, %v822
        %v849 = vrot.slane %v822, 4
        %v850 = vsel %vm811, %v834, %v849
        %v852 = vunpack.c.l.s4 1934713408
        %v853 = vunpack.c.0.s8 %v852
        %v854 = vperm.slane %v848, %v853
        %v856 = vunpack.c.l.s4 1934713408
        %v857 = vunpack.c.0.s8 %v856
        %v858 = vperm.slane %v850, %v857
        %v859 = vrot.slane %v842, 4
        %v860 = vsel %vm811, 0.0, %v859
        %v861 = vrot.slane %v846, 4
        %v862 = vsel %vm811, 0.0, %v861
        %v863 = vrot.slane %v854, 4
        %v864 = vsel %vm811, 0.0, %v863
        %v865 = vrot.slane %v858, 4
        %v866 = vsel %vm811, 0.0, %v865
        %v867 = vsel %vm811, %v861, %v842
        %v869 = vunpack.c.l.s4 1983009808
        %v870 = vunpack.c.0.s8 %v869
        %v871 = vperm.slane %v867, %v870
        %v872 = vrot.slane %v862, 4
        %v873 = vsel %vm811, %v872, %v860
        %v875 = vunpack.c.l.s4 1983009808
        %v876 = vunpack.c.0.s8 %v875
        %v877 = vperm.slane %v873, %v876
        %v878 = vsel %vm811, %v865, %v854
        %v880 = vunpack.c.l.s4 1983009808
        %v881 = vunpack.c.0.s8 %v880
        %v882 = vperm.slane %v878, %v881
        %v883 = vrot.slane %v866, 4
        %v884 = vsel %vm811, %v883, %v864
        %v886 = vunpack.c.l.s4 1983009808
        %v887 = vunpack.c.0.s8 %v886
        %v888 = vperm.slane %v884, %v887
        %v889 = vrot.slane %v877, 4
        %v890 = vsel %vm811, %v889, %v871
        %v891 = vrot.slane %v871, 4
        %v892 = vsel %vm811, %v877, %v891
        %v894 = vunpack.c.l.s4 1934713408
        %v895 = vunpack.c.0.s8 %v894
        %v896 = vperm.slane %v890, %v895
        %v898 = vunpack.c.l.s4 1934713408
        %v899 = vunpack.c.0.s8 %v898
        %v900 = vperm.slane %v892, %v899
        %v901 = vrot.slane %v888, 4
        %v902 = vsel %vm811, %v901, %v882
        %v903 = vrot.slane %v882, 4
        %v904 = vsel %vm811, %v888, %v903
        %v906 = vunpack.c.l.s4 1934713408
        %v907 = vunpack.c.0.s8 %v906
        %v908 = vperm.slane %v902, %v907
        %v910 = vunpack.c.l.s4 1934713408
        %v911 = vunpack.c.0.s8 %v910
        %v912 = vperm.slane %v904, %v911
        %v913 = vrot.slane %v908, 4
        %v914 = vsel %vm811, %v913, %v896
        %v915 = vrot.slane %v896, 4
        %v916 = vsel %vm811, %v908, %v915
        %v917 = vrot.slane %v912, 4
        %v918 = vsel %vm811, %v917, %v900
        %v919 = vrot.slane %v900, 4
        %v920 = vsel %vm811, %v912, %v919
        %922 = vrot.lane.b32.xlu0 %v767, 120
        %v923 = vpop.permute.xlu0 %922
        %925 = vrot.lane.b32.xlu0 %v767, 112
        %v926 = vpop.permute.xlu0 %925
        %928 = vrot.lane.b32.xlu0 %v767, 104
        %v929 = vpop.permute.xlu0 %928
        %v931 = vrot.slane %v926, 4
        %v932 = vsel %vm811, %v931, %v767
        %v933 = vrot.slane %v767, 4
        %v934 = vsel %vm811, %v926, %v933
        %v936 = vunpack.c.l.s4 1983009808
        %v937 = vunpack.c.0.s8 %v936
        %v938 = vperm.slane %v932, %v937
        %v940 = vunpack.c.l.s4 1983009808
        %v941 = vunpack.c.0.s8 %v940
        %v942 = vperm.slane %v934, %v941
        %v943 = vrot.slane %v929, 4
        %v944 = vsel %vm811, %v943, %v923
        %v945 = vrot.slane %v923, 4
        %v946 = vsel %vm811, %v929, %v945
        %v948 = vunpack.c.l.s4 1983009808
        %v949 = vunpack.c.0.s8 %v948
        %v950 = vperm.slane %v944, %v949
        %v952 = vunpack.c.l.s4 1983009808
        %v953 = vunpack.c.0.s8 %v952
        %v954 = vperm.slane %v946, %v953
        %v955 = vrot.slane %v950, 4
        %v956 = vsel %vm811, %v955, %v938
        %v957 = vrot.slane %v938, 4
        %v958 = vsel %vm811, %v950, %v957
        %v960 = vunpack.c.l.s4 1934713408
        %v961 = vunpack.c.0.s8 %v960
        %v962 = vperm.slane %v956, %v961
        %v964 = vunpack.c.l.s4 1934713408
        %v965 = vunpack.c.0.s8 %v964
        %v966 = vperm.slane %v958, %v965
        %v967 = vrot.slane %v954, 4
        %v968 = vsel %vm811, %v967, %v942
        %v969 = vrot.slane %v942, 4
        %v970 = vsel %vm811, %v954, %v969
        %v972 = vunpack.c.l.s4 1934713408
        %v973 = vunpack.c.0.s8 %v972
        %v974 = vperm.slane %v968, %v973
        %v976 = vunpack.c.l.s4 1934713408
        %v977 = vunpack.c.0.s8 %v976
        %v978 = vperm.slane %v970, %v977
        %v979 = vrot.slane %v962, 4
        %v980 = vsel %vm811, 0.0, %v979
        %v981 = vrot.slane %v966, 4
        %v982 = vsel %vm811, 0.0, %v981
        %v983 = vrot.slane %v974, 4
        %v984 = vsel %vm811, 0.0, %v983
        %v985 = vrot.slane %v978, 4
        %v986 = vsel %vm811, 0.0, %v985
        %v987 = vsel %vm811, %v981, %v962
        %v989 = vunpack.c.l.s4 1983009808
        %v990 = vunpack.c.0.s8 %v989
        %v991 = vperm.slane %v987, %v990
        %v992 = vrot.slane %v982, 4
        %v993 = vsel %vm811, %v992, %v980
        %v995 = vunpack.c.l.s4 1983009808
        %v996 = vunpack.c.0.s8 %v995
        %v997 = vperm.slane %v993, %v996
        %v998 = vsel %vm811, %v985, %v974
        %v1000 = vunpack.c.l.s4 1983009808
        %v1001 = vunpack.c.0.s8 %v1000
        %v1002 = vperm.slane %v998, %v1001
        %v1003 = vrot.slane %v986, 4
        %v1004 = vsel %vm811, %v1003, %v984
        %v1006 = vunpack.c.l.s4 1983009808
        %v1007 = vunpack.c.0.s8 %v1006
        %v1008 = vperm.slane %v1004, %v1007
        %v1009 = vrot.slane %v997, 4
        %v1010 = vsel %vm811, %v1009, %v991
        %v1011 = vrot.slane %v991, 4
        %v1012 = vsel %vm811, %v997, %v1011
        %v1014 = vunpack.c.l.s4 1934713408
        %v1015 = vunpack.c.0.s8 %v1014
        %v1016 = vperm.slane %v1010, %v1015
        %v1018 = vunpack.c.l.s4 1934713408
        %v1019 = vunpack.c.0.s8 %v1018
        %v1020 = vperm.slane %v1012, %v1019
        %v1021 = vrot.slane %v1008, 4
        %v1022 = vsel %vm811, %v1021, %v1002
        %v1023 = vrot.slane %v1002, 4
        %v1024 = vsel %vm811, %v1008, %v1023
        %v1026 = vunpack.c.l.s4 1934713408
        %v1027 = vunpack.c.0.s8 %v1026
        %v1028 = vperm.slane %v1022, %v1027
        %v1030 = vunpack.c.l.s4 1934713408
        %v1031 = vunpack.c.0.s8 %v1030
        %v1032 = vperm.slane %v1024, %v1031
        %v1033 = vrot.slane %v1028, 4
        %v1034 = vsel %vm811, %v1033, %v1016
        %v1035 = vrot.slane %v1016, 4
        %v1036 = vsel %vm811, %v1028, %v1035
        %v1037 = vrot.slane %v1032, 4
        %v1038 = vsel %vm811, %v1037, %v1020
        %v1039 = vrot.slane %v1020, 4
        %v1040 = vsel %vm811, %v1032, %v1039
        %1042 = vrot.lane.b32.xlu0 %v798, 120
        %v1043 = vpop.permute.xlu0 %1042
        %1045 = vrot.lane.b32.xlu0 %v798, 112
        %v1046 = vpop.permute.xlu0 %1045
        %1048 = vrot.lane.b32.xlu0 %v798, 104
        %v1049 = vpop.permute.xlu0 %1048
        %v1051 = vrot.slane %v1046, 4
        %v1052 = vsel %vm811, %v1051, %v798
        %v1053 = vrot.slane %v798, 4
        %v1054 = vsel %vm811, %v1046, %v1053
        %v1056 = vunpack.c.l.s4 1983009808
        %v1057 = vunpack.c.0.s8 %v1056
        %v1058 = vperm.slane %v1052, %v1057
        %v1060 = vunpack.c.l.s4 1983009808
        %v1061 = vunpack.c.0.s8 %v1060
        %v1062 = vperm.slane %v1054, %v1061
        %v1063 = vrot.slane %v1049, 4
        %v1064 = vsel %vm811, %v1063, %v1043
        %v1065 = vrot.slane %v1043, 4
        %v1066 = vsel %vm811, %v1049, %v1065
        %v1068 = vunpack.c.l.s4 1983009808
        %v1069 = vunpack.c.0.s8 %v1068
        %v1070 = vperm.slane %v1064, %v1069
        %v1072 = vunpack.c.l.s4 1983009808
        %v1073 = vunpack.c.0.s8 %v1072
        %v1074 = vperm.slane %v1066, %v1073
        %v1075 = vrot.slane %v1070, 4
        %v1076 = vsel %vm811, %v1075, %v1058
        %v1077 = vrot.slane %v1058, 4
        %v1078 = vsel %vm811, %v1070, %v1077
        %v1080 = vunpack.c.l.s4 1934713408
        %v1081 = vunpack.c.0.s8 %v1080
        %v1082 = vperm.slane %v1076, %v1081
        %v1084 = vunpack.c.l.s4 1934713408
        %v1085 = vunpack.c.0.s8 %v1084
        %v1086 = vperm.slane %v1078, %v1085
        %v1087 = vrot.slane %v1074, 4
        %v1088 = vsel %vm811, %v1087, %v1062
        %v1089 = vrot.slane %v1062, 4
        %v1090 = vsel %vm811, %v1074, %v1089
        %v1092 = vunpack.c.l.s4 1934713408
        %v1093 = vunpack.c.0.s8 %v1092
        %v1094 = vperm.slane %v1088, %v1093
        %v1096 = vunpack.c.l.s4 1934713408
        %v1097 = vunpack.c.0.s8 %v1096
        %v1098 = vperm.slane %v1090, %v1097
        %v1099 = vrot.slane %v1082, 4
        %v1100 = vsel %vm811, 0.0, %v1099
        %v1101 = vrot.slane %v1086, 4
        %v1102 = vsel %vm811, 0.0, %v1101
        %v1103 = vrot.slane %v1094, 4
        %v1104 = vsel %vm811, 0.0, %v1103
        %v1105 = vrot.slane %v1098, 4
        %v1106 = vsel %vm811, 0.0, %v1105
        %v1107 = vsel %vm811, %v1101, %v1082
        %v1109 = vunpack.c.l.s4 1983009808
        %v1110 = vunpack.c.0.s8 %v1109
        %v1111 = vperm.slane %v1107, %v1110
        %v1112 = vrot.slane %v1102, 4
        %v1113 = vsel %vm811, %v1112, %v1100
        %v1115 = vunpack.c.l.s4 1983009808
        %v1116 = vunpack.c.0.s8 %v1115
        %v1117 = vperm.slane %v1113, %v1116
        %v1118 = vsel %vm811, %v1105, %v1094
        %v1120 = vunpack.c.l.s4 1983009808
        %v1121 = vunpack.c.0.s8 %v1120
        %v1122 = vperm.slane %v1118, %v1121
        %v1123 = vrot.slane %v1106, 4
        %v1124 = vsel %vm811, %v1123, %v1104
        %v1126 = vunpack.c.l.s4 1983009808
        %v1127 = vunpack.c.0.s8 %v1126
        %v1128 = vperm.slane %v1124, %v1127
        %v1129 = vrot.slane %v1117, 4
        %v1130 = vsel %vm811, %v1129, %v1111
        %v1131 = vrot.slane %v1111, 4
        %v1132 = vsel %vm811, %v1117, %v1131
        %v1134 = vunpack.c.l.s4 1934713408
        %v1135 = vunpack.c.0.s8 %v1134
        %v1136 = vperm.slane %v1130, %v1135
        %v1138 = vunpack.c.l.s4 1934713408
        %v1139 = vunpack.c.0.s8 %v1138
        %v1140 = vperm.slane %v1132, %v1139
        %v1141 = vrot.slane %v1128, 4
        %v1142 = vsel %vm811, %v1141, %v1122
        %v1143 = vrot.slane %v1122, 4
        %v1144 = vsel %vm811, %v1128, %v1143
        %v1146 = vunpack.c.l.s4 1934713408
        %v1147 = vunpack.c.0.s8 %v1146
        %v1148 = vperm.slane %v1142, %v1147
        %v1150 = vunpack.c.l.s4 1934713408
        %v1151 = vunpack.c.0.s8 %v1150
        %v1152 = vperm.slane %v1144, %v1151
        %v1153 = vrot.slane %v1148, 4
        %v1154 = vsel %vm811, %v1153, %v1136
        %v1155 = vrot.slane %v1136, 4
        %v1156 = vsel %vm811, %v1148, %v1155
        %v1157 = vrot.slane %v1152, 4
        %v1158 = vsel %vm811, %v1157, %v1140
        %v1159 = vrot.slane %v1140, 4
        %v1160 = vsel %vm811, %v1152, %v1159
        %vm1161 = vcmask 64512
        %v1163 = vsel %vm1161, %v914, 0
        %v1166 = vsel %vm1161, %v1034, 0
        %1168 = vmatpush.xpose.msra.mxu0 0.0
        %1169 = vmatpush.xpose.msra.mxu0 0.0
        %1170 = vmatpush.xpose.msra.mxu0 0.0
        %1171 = vmatpush.xpose.msra.mxu0 0.0
        %1172 = vmatpush.xpose.msra.mxu0 0.0
        %1173 = vmatpush.xpose.msra.mxu0 0.0
        %1174 = vmatpush.xpose.msra.mxu0 0.0
        %1175 = vmatpush.xpose.msra.mxu0 0.0
        %1176 = vmatpush.xpose.msra.mxu0 0.0
        %1177 = vmatpush.xpose.msra.mxu0 0.0
        %1178 = vmatpush.xpose.msra.mxu0 0.0
        %1179 = vmatpush.xpose.msra.mxu0 0.0
        %1180 = vmatpush.xpose.msra.mxu0 0.0
        %1181 = vmatpush.xpose.msra.mxu0 0.0
        %1182 = vmatpush.xpose.msra.mxu0 0.0
        %1183 = vmatpush.xpose.msra.mxu0 %v1166
        %1184 = vmatmul.f32.gmra.mxu0 %v1163
        %v1185 = vpop.f32.mrf.mxu0
        %v1186 = vadd.f32 0.0, %v1185
        %1187 = vdwg.mxu0
        %v1189 = vsel %vm1161, %v916, 0
        %v1192 = vsel %vm1161, %v1036, 0
        %1194 = vmatpush.xpose.msra.mxu0 0.0
        %1195 = vmatpush.xpose.msra.mxu0 0.0
        %1196 = vmatpush.xpose.msra.mxu0 0.0
        %1197 = vmatpush.xpose.msra.mxu0 0.0
        %1198 = vmatpush.xpose.msra.mxu0 0.0
        %1199 = vmatpush.xpose.msra.mxu0 0.0
        %1200 = vmatpush.xpose.msra.mxu0 0.0
        %1201 = vmatpush.xpose.msra.mxu0 0.0
        %1202 = vmatpush.xpose.msra.mxu0 0.0
        %1203 = vmatpush.xpose.msra.mxu0 0.0
        %1204 = vmatpush.xpose.msra.mxu0 0.0
        %1205 = vmatpush.xpose.msra.mxu0 0.0
        %1206 = vmatpush.xpose.msra.mxu0 0.0
        %1207 = vmatpush.xpose.msra.mxu0 0.0
        %1208 = vmatpush.xpose.msra.mxu0 0.0
        %1209 = vmatpush.xpose.msra.mxu0 %v1192
        %1210 = vmatmul.f32.gmra.mxu0 %v1189
        %v1211 = vpop.f32.mrf.mxu0
        %v1212 = vadd.f32 0.0, %v1211
        %1213 = vdwg.mxu0
        %v1215 = vsel %vm1161, %v918, 0
        %v1218 = vsel %vm1161, %v1038, 0
        %1220 = vmatpush.xpose.msra.mxu0 0.0
        %1221 = vmatpush.xpose.msra.mxu0 0.0
        %1222 = vmatpush.xpose.msra.mxu0 0.0
        %1223 = vmatpush.xpose.msra.mxu0 0.0
        %1224 = vmatpush.xpose.msra.mxu0 0.0
        %1225 = vmatpush.xpose.msra.mxu0 0.0
        %1226 = vmatpush.xpose.msra.mxu0 0.0
        %1227 = vmatpush.xpose.msra.mxu0 0.0
        %1228 = vmatpush.xpose.msra.mxu0 0.0
        %1229 = vmatpush.xpose.msra.mxu0 0.0
        %1230 = vmatpush.xpose.msra.mxu0 0.0
        %1231 = vmatpush.xpose.msra.mxu0 0.0
        %1232 = vmatpush.xpose.msra.mxu0 0.0
        %1233 = vmatpush.xpose.msra.mxu0 0.0
        %1234 = vmatpush.xpose.msra.mxu0 0.0
        %1235 = vmatpush.xpose.msra.mxu0 %v1218
        %1236 = vmatmul.f32.gmra.mxu0 %v1215
        %v1237 = vpop.f32.mrf.mxu0
        %v1238 = vadd.f32 0.0, %v1237
        %1239 = vdwg.mxu0
        %v1241 = vsel %vm1161, %v920, 0
        %v1244 = vsel %vm1161, %v1040, 0
        %1246 = vmatpush.xpose.msra.mxu0 0.0
        %1247 = vmatpush.xpose.msra.mxu0 0.0
        %1248 = vmatpush.xpose.msra.mxu0 0.0
        %1249 = vmatpush.xpose.msra.mxu0 0.0
        %1250 = vmatpush.xpose.msra.mxu0 0.0
        %1251 = vmatpush.xpose.msra.mxu0 0.0
        %1252 = vmatpush.xpose.msra.mxu0 0.0
        %1253 = vmatpush.xpose.msra.mxu0 0.0
        %1254 = vmatpush.xpose.msra.mxu0 0.0
        %1255 = vmatpush.xpose.msra.mxu0 0.0
        %1256 = vmatpush.xpose.msra.mxu0 0.0
        %1257 = vmatpush.xpose.msra.mxu0 0.0
        %1258 = vmatpush.xpose.msra.mxu0 0.0
        %1259 = vmatpush.xpose.msra.mxu0 0.0
        %1260 = vmatpush.xpose.msra.mxu0 0.0
        %1261 = vmatpush.xpose.msra.mxu0 %v1244
        %1262 = vmatmul.f32.gmra.mxu0 %v1241
        %v1263 = vpop.f32.mrf.mxu0
        %v1264 = vadd.f32 0.0, %v1263
        %1265 = vdwg.mxu0
        %v1266 = vmul.f32 %v1186, 0.35355338
        %v1267 = vmul.f32 %v1212, 0.35355338
        %v1268 = vmul.f32 %v1238, 0.35355338
        %v1269 = vmul.f32 %v1264, 0.35355338
        %v1270 = vld [vmem:[%s615] sm:$0xff]
        %vm1271 = vcmp.ne.s32.totalorder %v1270, 0
        %v1272 = vsel %vm1271, 1, 0
        %vm1273 = vcmp.eq.s32.totalorder %v1272, 1
        %v1274 = vsel %vm1273, -1e+09, %v1266
        %v1275 = vsel %vm1273, -1e+09, %v1267
        %v1276 = vsel %vm1273, -1e+09, %v1268
        %v1277 = vsel %vm1273, -1e+09, %v1269
        %v1278 = vsel %vm1161, %v1274, -inf
        %1279 = vmax.xlane.f32.xlu0 %v1278
        %v1280 = vpop.xlane.xlu0 %1279
        %v1281 = vsel %vm1161, %v1275, -inf
        %1282 = vmax.xlane.f32.xlu0 %v1281
        %v1283 = vpop.xlane.xlu0 %1282
        %v1284 = vsel %vm1161, %v1276, -inf
        %1285 = vmax.xlane.f32.xlu0 %v1284
        %v1286 = vpop.xlane.xlu0 %1285
        %v1287 = vsel %vm1161, %v1277, -inf
        %1288 = vmax.xlane.f32.xlu0 %v1287
        %v1289 = vpop.xlane.xlu0 %1288
        %v1290 = vsub.f32 %v1274, %v1280
        %v1291 = vsub.f32 %v1275, %v1283
        %v1292 = vsub.f32 %v1276, %v1286
        %v1293 = vsub.f32 %v1277, %v1289
        %v1294 = vmul.f32 %v1290, 1.442695
        %v1295 = vpow.pop %v1294
        %v1296 = vmul.f32 %v1291, 1.442695
        %v1297 = vpow.pop %v1296
        %v1298 = vmul.f32 %v1292, 1.442695
        %v1299 = vpow.pop %v1298
        %v1300 = vmul.f32 %v1293, 1.442695
        %v1301 = vpow.pop %v1300
        %v1302 = vsel %vm1161, %v1295, 0.0
        %1303 = vadd.xlane.f32.xlu0 %v1302
        %v1304 = vpop.xlane.xlu0 %1303
        %v1305 = vsel %vm1161, %v1297, 0.0
        %1306 = vadd.xlane.f32.xlu0 %v1305
        %v1307 = vpop.xlane.xlu0 %1306
        %v1308 = vsel %vm1161, %v1299, 0.0
        %1309 = vadd.xlane.f32.xlu0 %v1308
        %v1310 = vpop.xlane.xlu0 %1309
        %v1311 = vsel %vm1161, %v1301, 0.0
        %1312 = vadd.xlane.f32.xlu0 %v1311
        %v1313 = vpop.xlane.xlu0 %1312
        %v1314 = vrcp.pop %v1304
        %v1315 = vmul.f32 %v1304, %v1314
        %v1316 = vsub.f32 1.0, %v1315
        %v1317 = vmul.f32 %v1314, %v1316
        %v1318 = vadd.f32 %v1314, %v1317
        %vm1319 = vweird.f32 %v1304
        %vm1320 = vweird.f32 %v1314
        %vm1321 = vmor %vm1319, %vm1320
        %v1322 = vsel %vm1321, %v1314, %v1318
        %v1323 = vand.u32 2147483647, %v1304
        %vm1324 = vcmp.eq.f32.partialorder %v1323, 8.507059e+37
        %v1325 = vand.u32 %v1304, 2147483648
        %v1326 = vor.u32 1.1754944e-38, %v1325
        %v1327 = vsel %vm1324, %v1326, %v1322
        %v1328 = vrcp.pop %v1307
        %v1329 = vmul.f32 %v1307, %v1328
        %v1330 = vsub.f32 1.0, %v1329
        %v1331 = vmul.f32 %v1328, %v1330
        %v1332 = vadd.f32 %v1328, %v1331
        %vm1333 = vweird.f32 %v1307
        %vm1334 = vweird.f32 %v1328
        %vm1335 = vmor %vm1333, %vm1334
        %v1336 = vsel %vm1335, %v1328, %v1332
        %v1337 = vand.u32 2147483647, %v1307
        %vm1338 = vcmp.eq.f32.partialorder %v1337, 8.507059e+37
        %v1339 = vand.u32 %v1307, 2147483648
        %v1340 = vor.u32 1.1754944e-38, %v1339
        %v1341 = vsel %vm1338, %v1340, %v1336
        %v1342 = vrcp.pop %v1310
        %v1343 = vmul.f32 %v1310, %v1342
        %v1344 = vsub.f32 1.0, %v1343
        %v1345 = vmul.f32 %v1342, %v1344
        %v1346 = vadd.f32 %v1342, %v1345
        %vm1347 = vweird.f32 %v1310
        %vm1348 = vweird.f32 %v1342
        %vm1349 = vmor %vm1347, %vm1348
        %v1350 = vsel %vm1349, %v1342, %v1346
        %v1351 = vand.u32 2147483647, %v1310
        %vm1352 = vcmp.eq.f32.partialorder %v1351, 8.507059e+37
        %v1353 = vand.u32 %v1310, 2147483648
        %v1354 = vor.u32 1.1754944e-38, %v1353
        %v1355 = vsel %vm1352, %v1354, %v1350
        %v1356 = vrcp.pop %v1313
        %v1357 = vmul.f32 %v1313, %v1356
        %v1358 = vsub.f32 1.0, %v1357
        %v1359 = vmul.f32 %v1356, %v1358
        %v1360 = vadd.f32 %v1356, %v1359
        %vm1361 = vweird.f32 %v1313
        %vm1362 = vweird.f32 %v1356
        %vm1363 = vmor %vm1361, %vm1362
        %v1364 = vsel %vm1363, %v1356, %v1360
        %v1365 = vand.u32 2147483647, %v1313
        %vm1366 = vcmp.eq.f32.partialorder %v1365, 8.507059e+37
        %v1367 = vand.u32 %v1313, 2147483648
        %v1368 = vor.u32 1.1754944e-38, %v1367
        %v1369 = vsel %vm1366, %v1368, %v1364
        %v1370 = vmul.f32 %v1295, %v1327
        %v1371 = vmul.f32 %v1297, %v1341
        %v1372 = vmul.f32 %v1299, %v1355
        %v1373 = vmul.f32 %v1301, %v1369
        %1374 = vst.msk [vmem:[%s702] sm:$0xff] %vm1161, %v1370
        %1375 = vst.msk [vmem:[%s702 + $0x8] sm:$0xff] %vm1161, %v1371
        %1376 = vst.msk [vmem:[%s702 + $0x10] sm:$0xff] %vm1161, %v1372
        %1377 = vst.msk [vmem:[%s702 + $0x18] sm:$0xff] %vm1161, %v1373
        %v1379 = vsel %vm1161, %v1370, 0
        %1381 = vmatpush.msra.mxu0 0.0
        %1382 = vmatpush.msra.mxu0 0.0
        %1383 = vmatpush.msra.mxu0 0.0
        %1384 = vmatpush.msra.mxu0 0.0
        %1385 = vmatpush.msra.mxu0 0.0
        %1386 = vmatpush.msra.mxu0 0.0
        %1387 = vmatpush.msra.mxu0 0.0
        %1388 = vmatpush.msra.mxu0 0.0
        %1389 = vmatpush.msra.mxu0 0.0
        %1390 = vmatpush.msra.mxu0 0.0
        %1391 = vmatpush.msra.mxu0 0.0
        %1392 = vmatpush.msra.mxu0 0.0
        %1393 = vmatpush.msra.mxu0 0.0
        %1394 = vmatpush.msra.mxu0 0.0
        %1395 = vmatpush.msra.mxu0 0.0
        %1396 = vmatpush.msra.mxu0 %v1154
        %1397 = vmatmul.f32.gmra.mxu0 %v1379
        %v1398 = vpop.f32.mrf.mxu0
        %v1399 = vadd.f32 0.0, %v1398
        %1400 = vdwg.mxu0
        %v1402 = vsel %vm1161, %v1371, 0
        %1404 = vmatpush.msra.mxu0 0.0
        %1405 = vmatpush.msra.mxu0 0.0
        %1406 = vmatpush.msra.mxu0 0.0
        %1407 = vmatpush.msra.mxu0 0.0
        %1408 = vmatpush.msra.mxu0 0.0
        %1409 = vmatpush.msra.mxu0 0.0
        %1410 = vmatpush.msra.mxu0 0.0
        %1411 = vmatpush.msra.mxu0 0.0
        %1412 = vmatpush.msra.mxu0 0.0
        %1413 = vmatpush.msra.mxu0 0.0
        %1414 = vmatpush.msra.mxu0 0.0
        %1415 = vmatpush.msra.mxu0 0.0
        %1416 = vmatpush.msra.mxu0 0.0
        %1417 = vmatpush.msra.mxu0 0.0
        %1418 = vmatpush.msra.mxu0 0.0
        %1419 = vmatpush.msra.mxu0 %v1156
        %1420 = vmatmul.f32.gmra.mxu0 %v1402
        %v1421 = vpop.f32.mrf.mxu0
        %v1422 = vadd.f32 0.0, %v1421
        %1423 = vdwg.mxu0
        %v1425 = vsel %vm1161, %v1372, 0
        %1427 = vmatpush.msra.mxu0 0.0
        %1428 = vmatpush.msra.mxu0 0.0
        %1429 = vmatpush.msra.mxu0 0.0
        %1430 = vmatpush.msra.mxu0 0.0
        %1431 = vmatpush.msra.mxu0 0.0
        %1432 = vmatpush.msra.mxu0 0.0
        %1433 = vmatpush.msra.mxu0 0.0
        %1434 = vmatpush.msra.mxu0 0.0
        %1435 = vmatpush.msra.mxu0 0.0
        %1436 = vmatpush.msra.mxu0 0.0
        %1437 = vmatpush.msra.mxu0 0.0
        %1438 = vmatpush.msra.mxu0 0.0
        %1439 = vmatpush.msra.mxu0 0.0
        %1440 = vmatpush.msra.mxu0 0.0
        %1441 = vmatpush.msra.mxu0 0.0
        %1442 = vmatpush.msra.mxu0 %v1158
        %1443 = vmatmul.f32.gmra.mxu0 %v1425
        %v1444 = vpop.f32.mrf.mxu0
        %v1445 = vadd.f32 0.0, %v1444
        %1446 = vdwg.mxu0
        %v1448 = vsel %vm1161, %v1373, 0
        %1450 = vmatpush.msra.mxu0 0.0
        %1451 = vmatpush.msra.mxu0 0.0
        %1452 = vmatpush.msra.mxu0 0.0
        %1453 = vmatpush.msra.mxu0 0.0
        %1454 = vmatpush.msra.mxu0 0.0
        %1455 = vmatpush.msra.mxu0 0.0
        %1456 = vmatpush.msra.mxu0 0.0
        %1457 = vmatpush.msra.mxu0 0.0
        %1458 = vmatpush.msra.mxu0 0.0
        %1459 = vmatpush.msra.mxu0 0.0
        %1460 = vmatpush.msra.mxu0 0.0
        %1461 = vmatpush.msra.mxu0 0.0
        %1462 = vmatpush.msra.mxu0 0.0
        %1463 = vmatpush.msra.mxu0 0.0
        %1464 = vmatpush.msra.mxu0 0.0
        %1465 = vmatpush.msra.mxu0 %v1160
        %1466 = vmatmul.f32.gmra.mxu0 %v1448
        %v1467 = vpop.f32.mrf.mxu0
        %v1468 = vadd.f32 0.0, %v1467
        %1469 = vdwg.mxu0
        %v1470 = vrot.slane %v1445, 4
        %v1471 = vsel %vm811, %v1470, %v1399
        %v1472 = vrot.slane %v1399, 4
        %v1473 = vsel %vm811, %v1445, %v1472
        %v1475 = vunpack.c.l.s4 1983009808
        %v1476 = vunpack.c.0.s8 %v1475
        %v1477 = vperm.slane %v1471, %v1476
        %v1479 = vunpack.c.l.s4 1983009808
        %v1480 = vunpack.c.0.s8 %v1479
        %v1481 = vperm.slane %v1473, %v1480
        %v1482 = vrot.slane %v1468, 4
        %v1483 = vsel %vm811, %v1482, %v1422
        %v1484 = vrot.slane %v1422, 4
        %v1485 = vsel %vm811, %v1468, %v1484
        %v1487 = vunpack.c.l.s4 1983009808
        %v1488 = vunpack.c.0.s8 %v1487
        %v1489 = vperm.slane %v1483, %v1488
        %v1491 = vunpack.c.l.s4 1983009808
        %v1492 = vunpack.c.0.s8 %v1491
        %v1493 = vperm.slane %v1485, %v1492
        %v1494 = vrot.slane %v1489, 4
        %v1495 = vsel %vm811, %v1494, %v1477
        %v1496 = vrot.slane %v1477, 4
        %v1497 = vsel %vm811, %v1489, %v1496
        %v1499 = vunpack.c.l.s4 1934713408
        %v1500 = vunpack.c.0.s8 %v1499
        %v1501 = vperm.slane %v1495, %v1500
        %v1503 = vunpack.c.l.s4 1934713408
        %v1504 = vunpack.c.0.s8 %v1503
        %v1505 = vperm.slane %v1497, %v1504
        %v1506 = vrot.slane %v1493, 4
        %v1507 = vsel %vm811, %v1506, %v1481
        %v1508 = vrot.slane %v1481, 4
        %v1509 = vsel %vm811, %v1493, %v1508
        %v1511 = vunpack.c.l.s4 1934713408
        %v1512 = vunpack.c.0.s8 %v1511
        %v1513 = vperm.slane %v1507, %v1512
        %v1515 = vunpack.c.l.s4 1934713408
        %v1516 = vunpack.c.0.s8 %v1515
        %v1517 = vperm.slane %v1509, %v1516
        %v1518 = vrot.slane %v1501, 4
        %v1519 = vsel %vm811, 0.0, %v1518
        %v1520 = vrot.slane %v1505, 4
        %v1521 = vsel %vm811, 0.0, %v1520
        %v1522 = vrot.slane %v1513, 4
        %v1523 = vsel %vm811, 0.0, %v1522
        %v1524 = vrot.slane %v1517, 4
        %v1525 = vsel %vm811, 0.0, %v1524
        %v1526 = vsel %vm811, %v1520, %v1501
        %v1528 = vunpack.c.l.s4 1983009808
        %v1529 = vunpack.c.0.s8 %v1528
        %v1530 = vperm.slane %v1526, %v1529
        %v1531 = vrot.slane %v1521, 4
        %v1532 = vsel %vm811, %v1531, %v1519
        %v1534 = vunpack.c.l.s4 1983009808
        %v1535 = vunpack.c.0.s8 %v1534
        %v1536 = vperm.slane %v1532, %v1535
        %v1537 = vsel %vm811, %v1524, %v1513
        %v1539 = vunpack.c.l.s4 1983009808
        %v1540 = vunpack.c.0.s8 %v1539
        %v1541 = vperm.slane %v1537, %v1540
        %v1542 = vrot.slane %v1525, 4
        %v1543 = vsel %vm811, %v1542, %v1523
        %v1545 = vunpack.c.l.s4 1983009808
        %v1546 = vunpack.c.0.s8 %v1545
        %v1547 = vperm.slane %v1543, %v1546
        %v1548 = vrot.slane %v1536, 4
        %v1549 = vsel %vm811, %v1548, %v1530
        %v1550 = vrot.slane %v1530, 4
        %v1551 = vsel %vm811, %v1536, %v1550
        %v1553 = vunpack.c.l.s4 1934713408
        %v1554 = vunpack.c.0.s8 %v1553
        %v1555 = vperm.slane %v1549, %v1554
        %v1557 = vunpack.c.l.s4 1934713408
        %v1558 = vunpack.c.0.s8 %v1557
        %v1559 = vperm.slane %v1551, %v1558
        %v1560 = vrot.slane %v1547, 4
        %v1561 = vsel %vm811, %v1560, %v1541
        %v1562 = vrot.slane %v1541, 4
        %v1563 = vsel %vm811, %v1547, %v1562
        %v1565 = vunpack.c.l.s4 1934713408
        %v1566 = vunpack.c.0.s8 %v1565
        %v1567 = vperm.slane %v1561, %v1566
        %v1569 = vunpack.c.l.s4 1934713408
        %v1570 = vunpack.c.0.s8 %v1569
        %v1571 = vperm.slane %v1563, %v1570
        %v1572 = vrot.slane %v1567, 4
        %v1573 = vsel %vm811, %v1572, %v1555
        %v1574 = vrot.slane %v1555, 4
        %v1575 = vsel %vm811, %v1567, %v1574
        %v1576 = vrot.slane %v1571, 4
        %v1577 = vsel %vm811, %v1576, %v1559
        %v1578 = vrot.slane %v1559, 4
        %v1579 = vsel %vm811, %v1571, %v1578
        %1581 = vrot.lane.b32.xlu0 %v1575, 8
        %v1582 = vpop.permute.xlu0 %1581
        %1585 = vrot.lane.b32.xlu0 %v1577, 16
        %v1586 = vpop.permute.xlu0 %1585
        %1589 = vrot.lane.b32.xlu0 %v1579, 24
        %v1590 = vpop.permute.xlu0 %1589
        %v1592 = vsel %vm1161, %v1573, %v1582
        %vm1593 = vcmask 130048
        %v1594 = vsel %vm1593, %v1592, %v1586
        %vm1595 = vcmask 195584
        %v1596 = vsel %vm1595, %v1594, %v1590
        %v1597 = vld [vmem:[#allocation14] sm:$0xff]
        %v1598 = vld [vmem:[#allocation14 + $0x8] sm:$0xff]
        %v1599 = vld [vmem:[#allocation14 + $0x10] sm:$0xff]
        %v1600 = vld [vmem:[#allocation14 + $0x18] sm:$0xff]
        %v1601 = vld [vmem:[%s11] sm:$0x1]
        %v1603 = vperm.slane %v1601, 0
        %v1606 = vsel %vm714, %v1596, 0
        %1608 = vmatpush.msra.mxu0 0.0
        %1609 = vmatpush.msra.mxu0 0.0
        %1610 = vmatpush.msra.mxu0 0.0
        %1611 = vmatpush.msra.mxu0 0.0
        %1612 = vmatpush.msra.mxu0 0.0
        %1613 = vmatpush.msra.mxu0 0.0
        %1614 = vmatpush.msra.mxu0 0.0
        %1615 = vmatpush.msra.mxu0 0.0
        %1616 = vmatpush.msra.mxu0 0.0
        %1617 = vmatpush.msra.mxu0 0.0
        %1618 = vmatpush.msra.mxu0 0.0
        %1619 = vmatpush.msra.mxu0 0.0
        %1620 = vmatpush.msra.mxu0 %v1600
        %1621 = vmatpush.msra.mxu0 %v1599
        %1622 = vmatpush.msra.mxu0 %v1598
        %1623 = vmatpush.msra.mxu0 %v1597
        %1624 = vmatmul.f32.gmra.mxu0 %v1606
        %v1625 = vpop.f32.mrf.mxu0
        %v1626 = vadd.f32 %v1603, %v1625
        %1627 = vdwg.mxu0
        %v1628 = vadd.f32 %v1626, %v703
        %v1629 = vsel %vm714, %v1628, 0.0
        %1630 = vadd.xlane.f32.xlu0 %v1629
        %v1631 = vpop.xlane.xlu0 %1630
        %v1632 = vrcp.pop 32.0
        %v1633 = vmul.f32 32.0, %v1632
        %v1634 = vsub.f32 1.0, %v1633
        %v1635 = vmul.f32 %v1632, %v1634
        %v1636 = vadd.f32 %v1632, %v1635
        %vm1637 = vweird.f32 %v1632
        %v1638 = vsel %vm1637, %v1632, %v1636
        %v1639 = vmul.f32 %v1631, %v1638
        %v1640 = vsub.f32 %v1628, %v1639
        %v1641 = vmul.f32 %v1640, %v1640
        %v1642 = vsel %vm714, %v1641, 0.0
        %1643 = vadd.xlane.f32.xlu0 %v1642
        %v1644 = vpop.xlane.xlu0 %1643
        %v1645 = vmul.f32 %v1644, %v1638
        %v1646 = vadd.f32 %v1645, 1e-05
        %v1647 = vrsqrt.pop %v1646
        %v1648 = vmul.f32 %v1647, %v1646
        %v1649 = vmul.f32 %v1648, %v1647
        %v1650 = vmul.f32 0.5, %v1649
        %v1651 = vsub.f32 1.5, %v1650
        %v1652 = vmul.f32 %v1647, %v1651
        %vm1653 = vweird.f32 %v1646
        %vm1654 = vweird.f32 %v1647
        %vm1655 = vmor %vm1653, %vm1654
        %v1656 = vsel %vm1655, %v1647, %v1652
        %v1657 = vmul.f32 %v1640, %v1656
        %v1658 = vld [vmem:[%s12] sm:$0x1]
        %v1660 = vperm.slane %v1658, 0
        %v1662 = vmul.f32 %v1657, %v1660
        %v1663 = vld [vmem:[%s13] sm:$0x1]
        %v1665 = vperm.slane %v1663, 0
        %v1667 = vadd.f32 %v1662, %v1665
        %1668 = vst.msk [vmem:[%s695] sm:$0xff] %vm714, %v1667
        %s1669 = sand.u32 %s366, 1
        %s1670 = scalar_lea.sflag [#allocation4], %s1669
        %s1671 = sand.u32 %s366, 1
        %s1672 = smul.addr %s1671, 8
        %s1673 = scalar_lea.vmem [#allocation16], %s1672
        %s1674 = sand.u32 %s392, 1
        %s1675 = scalar_lea.sflag [#allocation18], %s1674
        %s1676 = sand.u32 %s392, 1
        %s1677 = smul.addr %s1676, 32
        %s1678 = scalar_lea.vmem [#allocation17], %s1677
        // Predicated region
        $region109: #{tpu_custom_call.1} parent=75 // pred_check
          %p1679 = pneg %p376
        $region110: #{tpu_custom_call.1} parent=75 // pred_check_branch
          %1681 = sbr.rel (%p1679) target = $region112
        $region111: #{tpu_custom_call.1} parent=75 // pred_region
          %1683 = vsyncadd %s1670, 0
          %s1684 = smul.addr %s44, 8
          %s1685 = scalar_lea.hbm %s14, %s1684
          %s1687 = sshll.u32 %s1673, 4
          %s1688 = int_to_ptr.vmem [resolvable:$true] %s1687
          %s1689 = sshll.u32 %s1685, 4
          %s1690 = int_to_ptr.hbm [resolvable:$true] %s1689
          %1692 = dma.vmem_to_hbm [thread:$0]  %s1688, 128, %s1690, %s1670
        $region112: #{tpu_custom_call.1} parent=75 // pred_fallthru
          _
        // Predicated region
        $region113: #{tpu_custom_call.1} parent=75 // pred_check
          %p1693 = pneg %p402
        $region114: #{tpu_custom_call.1} parent=75 // pred_check_branch
          %1695 = sbr.rel (%p1693) target = $region116
        $region115: #{tpu_custom_call.1} parent=75 // pred_region
          %1697 = vsyncadd %s1675, 0
          %s1698 = smul.addr %s44, 4
          %s1699 = smul.addr %s1698, 8
          %s1700 = scalar_lea.hbm %s15, %s1699
          %s1701 = sshll.u32 %s1678, 4
          %s1702 = int_to_ptr.vmem [resolvable:$true] %s1701
          %s1703 = sshll.u32 %s1700, 4
          %s1704 = int_to_ptr.hbm [resolvable:$true] %s1703
          %1709 = dma.vmem_to_hbm [thread:$0]  %s1702, 512, %s1704, %s1675, 128, 128, 8
        $region116: #{tpu_custom_call.1} parent=75 // pred_fallthru
          _
      $region76: #{tpu_custom_call.1} parent=5 // pred_fallthru
        _
      %p1710 = scmp.le.s32.totalorder 2, %s39
      // Predicated region
      $region117: #{tpu_custom_call.1} parent=5 // pred_check
        %p1711 = pneg %p1710
      $region118: #{tpu_custom_call.1} parent=5 // pred_check_branch
        %1713 = sbr.rel (%p1711) target = $region120
      $region119: #{tpu_custom_call.1} parent=5 // pred_region
        %s1714 = ssub.s32 %s39, 2
        // Predicated region
        $region121: #{tpu_custom_call.1} parent=119 // pred_check
          %p1715 = pneg %p382
        $region122: #{tpu_custom_call.1} parent=119 // pred_check_branch
          %1717 = sbr.rel (%p1715) target = $region124
        $region123: #{tpu_custom_call.1} parent=119 // pred_region
          %s1718 = sand.u32 %s367, 1
          %s1719 = scalar_lea.sflag [#allocation4], %s1718
          %s1720 = sand.u32 %s367, 1
          %s1721 = smul.addr %s1720, 8
          %s1722 = scalar_lea.vmem [#allocation16], %s1721
          %1724 = dma.done %s1719, 128
        $region124: #{tpu_custom_call.1} parent=119 // pred_fallthru
          _
        // Predicated region
        $region125: #{tpu_custom_call.1} parent=119 // pred_check
          %p1725 = pneg %p408
        $region126: #{tpu_custom_call.1} parent=119 // pred_check_branch
          %1727 = sbr.rel (%p1725) target = $region128
        $region127: #{tpu_custom_call.1} parent=119 // pred_region
          %s1728 = sand.u32 %s393, 1
          %s1729 = scalar_lea.sflag [#allocation18], %s1728
          %s1730 = sand.u32 %s393, 1
          %s1731 = smul.addr %s1730, 32
          %s1732 = scalar_lea.vmem [#allocation17], %s1731
          %1734 = dma.done %s1729, 512
        $region128: #{tpu_custom_call.1} parent=119 // pred_fallthru
          _
      $region120: #{tpu_custom_call.1} parent=5 // pred_fallthru
        _
    $region6: #{tpu_custom_call.1} parent=1 // loop_footer
      %s43 = sadd.s32 1, %s39
    $region7: #{tpu_custom_call.1} parent=1 // loop_footer_branch
      %38 = sbr.rel target = $region3
    $region8: #{tpu_custom_call.1} parent=1 // loop_exit
      _
    %1735 = vsyncpa [#allocation3], 1
    %s1736 = scalar_lea.sflag [#allocation3], 1
    %1737 = vsyncpa %s1736, 1
    %1738 = vsyncpa [#allocation6], 1
    %s1739 = scalar_lea.sflag [#allocation6], 1
    %1740 = vsyncpa %s1739, 1
    %1741 = vsyncpa [#allocation9], 1
    %s1742 = scalar_lea.sflag [#allocation9], 1
    %1743 = vsyncpa %s1742, 1
    %1744 = vsyncpa [#allocation12], 1
    %1745 = vsyncpa [#allocation15], 1
    %1746 = vsyncpa [#allocation4], 1
    %s1747 = scalar_lea.sflag [#allocation4], 1
    %1748 = vsyncpa %s1747, 1
    %1749 = vsyncpa [#allocation18], 1
    %s1750 = scalar_lea.sflag [#allocation18], 1
    %1751 = vsyncpa %s1750, 1

</llo_original>
